<compile_context>
chip_gen: v7x
topology: tpu7x:2x2x1
jax: 0.10.0
libtpu: 0.0.40
codegen_flags: <defaults>
</compile_context>

<pallas_src>
import jax
import jax.numpy as jnp
import numpy as np
from jax.experimental import pallas as pl
from jax.experimental.pallas import tpu as pltpu

# ---- model hyper-parameters (small, consistent with the module's __init__) ----
B = 2          # batch
N = 8          # sequence length
D_MODEL = 32
N_HEADS = 4
D_K = 8
D_V = 8
D_FF = 64
LN_EPS = 1e-5  # PyTorch nn.LayerNorm default

HDK = N_HEADS * D_K            # 32
HDV = N_HEADS * D_V            # 32
QKV_COLS = 2 * HDK + HDV       # 96
WSLAB_COLS = QKV_COLS + D_MODEL + D_FF   # 96 + 32 + 64 = 192
VEC_ROWS, VEC_COLS = 8, 128    # lane-dense packed vector slab


def encoder_layer_kernel(x_ref, wslab_ref, w2_ref, vecs_ref, out_ref):
    """One grid step == one batch element: (N, D_MODEL) tokens, all math on-chip."""
    x = x_ref[...]                                            # (N, D_MODEL)
    wslab = wslab_ref[...]                                    # (D_MODEL, 192)
    vs = vecs_ref[...]                                        # (8, 128)

    # ---- static column slices of the packed weight slab ----
    wqkv = wslab[:, 0:QKV_COLS]                               # (D, 96)  wq*scale | wk | wv
    wo = wslab[:, QKV_COLS:QKV_COLS + D_MODEL]                # (HDV, D) == (32, 32)
    w1 = wslab[:, QKV_COLS + D_MODEL:WSLAB_COLS]              # (D, D_FF)

    # ---- packed 1-row parameters ----
    b_qkv = vs[0:1, 0:QKV_COLS]                               # (1, 96)  bq*scale | bk | bv
    bf1 = vs[1:2, 0:D_FF]
    bo = vs[2:3, 0:D_MODEL]
    g1 = vs[3:4, 0:D_MODEL]
    be1 = vs[4:5, 0:D_MODEL]
    bf2 = vs[5:6, 0:D_MODEL]
    g2 = vs[6:7, 0:D_MODEL]
    be2 = vs[7:8, 0:D_MODEL]

    # ---- fused Q/K/V projection (scale already folded into the wq/bq columns) ----
    qkv = jnp.dot(x, wqkv, preferred_element_type=jnp.float32) + b_qkv    # (N, 96)

    # ---- per-head attention, accumulated straight into the output projection ----
    # TODO(synk): dropout (p>0) omitted — eval-mode identity.
    y = x + bo                                                # residual + output-proj bias
    for h in range(N_HEADS):
        qh = qkv[:, h * D_K:(h + 1) * D_K]                    # (N, D_K) slices of qkv
        kh = qkv[:, HDK + h * D_K:HDK + (h + 1) * D_K]
        vh = qkv[:, 2 * HDK + h * D_V:2 * HDK + (h + 1) * D_V]
        # qh @ kh^T without materializing the transpose (contract last axes).
        s = jax.lax.dot_general(qh, kh, (((1,), (1,)), ((), ())),
                                preferred_element_type=jnp.float32)       # (N, N)
        s = s - jnp.max(s, axis=-1, keepdims=True)
        p = jnp.exp(s)                                        # unnormalized probabilities
        rowsum = jnp.sum(p, axis=-1, keepdims=True)           # (N, 1)
        o_h = jnp.dot(p, vh, preferred_element_type=jnp.float32)          # (N, D_V)
        o_h = o_h * (1.0 / rowsum)                            # exact — keeps 1e-4 check
        # sublane-aligned wo row slice; partial matmul accumulates into y.
        y = y + jnp.dot(o_h, wo[h * D_V:(h + 1) * D_V, :],
                        preferred_element_type=jnp.float32)

    # ---- LayerNorm 1 ----
    mu = jnp.mean(y, axis=-1, keepdims=True)
    var = jnp.mean((y - mu) * (y - mu), axis=-1, keepdims=True)
    y = (y - mu) * jax.lax.rsqrt(var + LN_EPS) * g1 + be1

    # ---- position-wise feed-forward, residual, LayerNorm 2 ----
    h1 = jnp.dot(y, w1, preferred_element_type=jnp.float32) + bf1
    h1 = jnp.maximum(h1, 0.0)
    f = jnp.dot(h1, w2_ref[...], preferred_element_type=jnp.float32) + bf2
    z = f + y
    mu2 = jnp.mean(z, axis=-1, keepdims=True)
    var2 = jnp.mean((z - mu2) * (z - mu2), axis=-1, keepdims=True)
    out_ref[...] = (z - mu2) * jax.lax.rsqrt(var2 + LN_EPS) * g2 + be2


def pack_params(p):
    """One-time param transform: fold 1/sqrt(d_k) into wq/bq, fuse all D_MODEL-input
    weights into one slab, and pack every 1-row vector into a lane-dense (8,128) slab."""
    scale = 1.0 / (float(D_K) ** 0.5)
    wslab = jnp.concatenate(
        [p["wq"] * scale, p["wk"], p["wv"], p["wo"], p["w1"]], axis=1)   # (D, 192)

    b_qkv = jnp.concatenate([p["bq"] * scale, p["bk"], p["bv"]], axis=1)  # (1, 96)
    vecs = jnp.zeros((VEC_ROWS, VEC_COLS), jnp.float32)
    vecs = vecs.at[0, 0:QKV_COLS].set(b_qkv[0])
    vecs = vecs.at[1, 0:D_FF].set(p["bf1"][0])
    vecs = vecs.at[2, 0:D_MODEL].set(p["bo"][0])
    vecs = vecs.at[3, 0:D_MODEL].set(p["g1"][0])
    vecs = vecs.at[4, 0:D_MODEL].set(p["be1"][0])
    vecs = vecs.at[5, 0:D_MODEL].set(p["bf2"][0])
    vecs = vecs.at[6, 0:D_MODEL].set(p["g2"][0])
    vecs = vecs.at[7, 0:D_MODEL].set(p["be2"][0])

    return {"wslab": wslab, "w2": p["w2"], "vecs": vecs}


def transformer_encoder_layer(x, packed):
    """x: (B, N, D_MODEL) float32.  packed: output of pack_params()."""
    grid_spec = pltpu.PrefetchScalarGridSpec(
        num_scalar_prefetch=0,
        grid=(B,),                                           # batch-parallel grid
        in_specs=[
            pl.BlockSpec((None, N, D_MODEL), lambda b: (b, 0, 0)),       # x, batch-sliced
            pl.BlockSpec((D_MODEL, WSLAB_COLS), lambda b: (0, 0)),       # packed weights
            pl.BlockSpec((D_FF, D_MODEL), lambda b: (0, 0)),             # w2
            pl.BlockSpec((VEC_ROWS, VEC_COLS), lambda b: (0, 0)),        # packed vectors
        ],
        out_specs=pl.BlockSpec((None, N, D_MODEL), lambda b: (b, 0, 0)),
    )

    return pl.pallas_call(
        encoder_layer_kernel,
        out_shape=jax.ShapeDtypeStruct((B, N, D_MODEL), jnp.float32),
        grid_spec=grid_spec,
        compiler_params=pltpu.CompilerParams(dimension_semantics=("parallel",)),
    )(x, packed["wslab"], packed["w2"], packed["vecs"])


# ---------------- pure-JAX reference (mirrors the PyTorch forward) ----------------
def reference(x, p):
    def ln(y, g, b):
        mu = jnp.mean(y, axis=-1, keepdims=True)
        var = jnp.mean((y - mu) ** 2, axis=-1, keepdims=True)
        return (y - mu) / jnp.sqrt(var + LN_EPS) * g + b

    q = x @ p["wq"] + p["bq"]
    k = x @ p["wk"] + p["bk"]
    v = x @ p["wv"] + p["bv"]
    q = q.reshape(B, N, N_HEADS, D_K).transpose(0, 2, 1, 3)
    k = k.reshape(B, N, N_HEADS, D_K).transpose(0, 2, 1, 3)
    v = v.reshape(B, N, N_HEADS, D_V).transpose(0, 2, 1, 3)
    s = jnp.einsum("bhqd,bhkd->bhqk", q, k) / (D_K ** 0.5)
    a = jax.nn.softmax(s, axis=-1)
    o = jnp.einsum("bhqk,bhkd->bhqd", a, v).transpose(0, 2, 1, 3).reshape(B, N, N_HEADS * D_V)
    y = ln(o @ p["wo"] + p["bo"] + x, p["g1"], p["be1"])
    f = jnp.maximum(y @ p["w1"] + p["bf1"], 0.0) @ p["w2"] + p["bf2"]
    return ln(f + y, p["g2"], p["be2"])


def make_params(key):
    ks = jax.random.split(key, 8)

    def lin(k, din, dout):
        # stored as (in, out): y = x @ W + b  (== PyTorch x @ weight.T + bias)
        return 0.1 * jax.random.normal(k, (din, dout), jnp.float32)

    p = {
        "wq": lin(ks[0], D_MODEL, HDK), "bq": jnp.zeros((1, HDK), jnp.float32),
        "wk": lin(ks[1], D_MODEL, HDK), "bk": jnp.zeros((1, HDK), jnp.float32),
        "wv": lin(ks[2], D_MODEL, HDV), "bv": jnp.zeros((1, HDV), jnp.float32),
        "wo": lin(ks[3], HDV, D_MODEL),
        "bo": 0.01 * jax.random.normal(ks[4], (1, D_MODEL), jnp.float32),
        "g1": jnp.ones((1, D_MODEL), jnp.float32), "be1": jnp.zeros((1, D_MODEL), jnp.float32),
        "w1": lin(ks[5], D_MODEL, D_FF),
        "bf1": 0.01 * jax.random.normal(ks[6], (1, D_FF), jnp.float32),
        "w2": lin(ks[7], D_FF, D_MODEL), "bf2": jnp.zeros((1, D_MODEL), jnp.float32),
        "g2": jnp.ones((1, D_MODEL), jnp.float32), "be2": jnp.zeros((1, D_MODEL), jnp.float32),
    }
    return p


if __name__ == "__main__":
    key = jax.random.PRNGKey(0)
    kx, kp = jax.random.split(key)
    x = jax.random.normal(kx, (B, N, D_MODEL), jnp.float32)
    params = make_params(kp)
    packed = pack_params(params)          # one-time static param transform

    out = transformer_encoder_layer(x, packed)
    out = jax.block_until_ready(out)

    ref = reference(x, params)
    np.testing.assert_allclose(np.asarray(out), np.asarray(ref), rtol=1e-4, atol=1e-4)

    print("KERNEL_OK")
</pallas_src>

<mosaic_0001>
module attributes {stable_mosaic.version = 11 : i64} {
  func.func @encoder_layer_kernel(%arg0: i32, %arg1: memref<1x8x32xf32, #tpu.memory_space<vmem>>, %arg2: memref<32x192xf32, #tpu.memory_space<vmem>>, %arg3: memref<64x32xf32, #tpu.memory_space<vmem>>, %arg4: memref<8x128xf32, #tpu.memory_space<vmem>>, %arg5: memref<1x8x32xf32, #tpu.memory_space<vmem>>) attributes {dimension_semantics = [#tpu.dimension_semantics<parallel>], iteration_bounds = array<i64: 2>, scalar_prefetch = 0 : i64, scratch_operands = 0 : i64, tpu.core_type = #tpu.core_type<tc>, window_params = [{transform_indices = @transform_0, window_bounds = array<i64: 1, 8, 32>}, {pipeline_mode = #tpu.pipeline_mode<synchronous>, transform_indices = @transform_1, window_bounds = array<i64: 32, 192>}, {pipeline_mode = #tpu.pipeline_mode<synchronous>, transform_indices = @transform_2, window_bounds = array<i64: 64, 32>}, {pipeline_mode = #tpu.pipeline_mode<synchronous>, transform_indices = @transform_3, window_bounds = array<i64: 8, 128>}, {transform_indices = @transform_4, window_bounds = array<i64: 1, 8, 32>}]} {
    %c0 = arith.constant 0 : index
    %c0_0 = arith.constant 0 : index
    %c0_1 = arith.constant 0 : index
    %0 = vector.load %arg1[%c0, %c0_0, %c0_1] : memref<1x8x32xf32, #tpu.memory_space<vmem>>, vector<1x8x32xf32>
    %1 = vector.shape_cast %0 : vector<1x8x32xf32> to vector<8x32xf32>
    %c0_2 = arith.constant 0 : index
    %c0_3 = arith.constant 0 : index
    %2 = vector.load %arg2[%c0_2, %c0_3] : memref<32x192xf32, #tpu.memory_space<vmem>>, vector<32x192xf32>
    %c0_4 = arith.constant 0 : index
    %c0_5 = arith.constant 0 : index
    %3 = vector.load %arg4[%c0_4, %c0_5] : memref<8x128xf32, #tpu.memory_space<vmem>>, vector<8x128xf32>
    %4 = vector.extract_strided_slice %2 {offsets = [0, 0], sizes = [32, 96], strides = [1, 1]} : vector<32x192xf32> to vector<32x96xf32>
    %5 = vector.extract_strided_slice %2 {offsets = [0, 96], sizes = [32, 32], strides = [1, 1]} : vector<32x192xf32> to vector<32x32xf32>
    %6 = vector.extract_strided_slice %2 {offsets = [0, 128], sizes = [32, 64], strides = [1, 1]} : vector<32x192xf32> to vector<32x64xf32>
    %7 = vector.extract_strided_slice %3 {offsets = [0, 0], sizes = [1, 96], strides = [1, 1]} : vector<8x128xf32> to vector<1x96xf32>
    %8 = vector.extract_strided_slice %3 {offsets = [1, 0], sizes = [1, 64], strides = [1, 1]} : vector<8x128xf32> to vector<1x64xf32>
    %9 = vector.extract_strided_slice %3 {offsets = [2, 0], sizes = [1, 32], strides = [1, 1]} : vector<8x128xf32> to vector<1x32xf32>
    %10 = vector.extract_strided_slice %3 {offsets = [3, 0], sizes = [1, 32], strides = [1, 1]} : vector<8x128xf32> to vector<1x32xf32>
    %11 = vector.extract_strided_slice %3 {offsets = [4, 0], sizes = [1, 32], strides = [1, 1]} : vector<8x128xf32> to vector<1x32xf32>
    %12 = vector.extract_strided_slice %3 {offsets = [5, 0], sizes = [1, 32], strides = [1, 1]} : vector<8x128xf32> to vector<1x32xf32>
    %13 = vector.extract_strided_slice %3 {offsets = [6, 0], sizes = [1, 32], strides = [1, 1]} : vector<8x128xf32> to vector<1x32xf32>
    %14 = vector.extract_strided_slice %3 {offsets = [7, 0], sizes = [1, 32], strides = [1, 1]} : vector<8x128xf32> to vector<1x32xf32>
    %cst = arith.constant dense<0.000000e+00> : vector<8x96xf32>
    %15 = tpu.matmul %1, %4, %cst {dimension_numbers = #tpu.dot_dimension_numbers<[1], [0], [0], [1], [0, 0, 1, 1], [], []>} : vector<8x32xf32>, vector<32x96xf32>, vector<8x96xf32> -> vector<8x96xf32>
    %16 = vector.broadcast %7 : vector<1x96xf32> to vector<8x96xf32>
    %17 = arith.addf %15, %16 : vector<8x96xf32>
    %18 = vector.broadcast %9 : vector<1x32xf32> to vector<8x32xf32>
    %19 = arith.addf %1, %18 : vector<8x32xf32>
    %20 = vector.extract_strided_slice %17 {offsets = [0, 0], sizes = [8, 8], strides = [1, 1]} : vector<8x96xf32> to vector<8x8xf32>
    %21 = vector.extract_strided_slice %17 {offsets = [0, 32], sizes = [8, 8], strides = [1, 1]} : vector<8x96xf32> to vector<8x8xf32>
    %22 = vector.extract_strided_slice %17 {offsets = [0, 64], sizes = [8, 8], strides = [1, 1]} : vector<8x96xf32> to vector<8x8xf32>
    %cst_6 = arith.constant dense<0.000000e+00> : vector<8x8xf32>
    %23 = tpu.matmul %20, %21, %cst_6 {dimension_numbers = #tpu.dot_dimension_numbers<[1], [1], [0], [0], [0, 0, 1, 0], [], []>} : vector<8x8xf32>, vector<8x8xf32>, vector<8x8xf32> -> vector<8x8xf32>
    %cst_7 = arith.constant dense<0xFF800000> : vector<8xf32>
    %24 = vector.multi_reduction <maximumf>, %23, %cst_7 [1] : vector<8x8xf32> to vector<8xf32>
    %25 = vector.shape_cast %24 : vector<8xf32> to vector<8x1xf32>
    %26 = vector.broadcast %25 : vector<8x1xf32> to vector<8x8xf32>
    %27 = arith.subf %23, %26 : vector<8x8xf32>
    %28 = math.exp %27 : vector<8x8xf32>
    %cst_8 = arith.constant dense<0.000000e+00> : vector<8xf32>
    %29 = vector.multi_reduction <add>, %28, %cst_8 [1] : vector<8x8xf32> to vector<8xf32>
    %30 = vector.shape_cast %29 : vector<8xf32> to vector<8x1xf32>
    %cst_9 = arith.constant dense<0.000000e+00> : vector<8x8xf32>
    %31 = tpu.matmul %28, %22, %cst_9 {dimension_numbers = #tpu.dot_dimension_numbers<[1], [0], [0], [1], [0, 0, 1, 1], [], []>} : vector<8x8xf32>, vector<8x8xf32>, vector<8x8xf32> -> vector<8x8xf32>
    %cst_10 = arith.constant 1.000000e+00 : f32
    %32 = vector.broadcast %cst_10 : f32 to vector<8x1xf32>
    %33 = arith.divf %32, %30 : vector<8x1xf32>
    %34 = vector.broadcast %33 : vector<8x1xf32> to vector<8x8xf32>
    %35 = arith.mulf %31, %34 : vector<8x8xf32>
    %36 = vector.extract_strided_slice %5 {offsets = [0, 0], sizes = [8, 32], strides = [1, 1]} : vector<32x32xf32> to vector<8x32xf32>
    %cst_11 = arith.constant dense<0.000000e+00> : vector<8x32xf32>
    %37 = tpu.matmul %35, %36, %cst_11 {dimension_numbers = #tpu.dot_dimension_numbers<[1], [0], [0], [1], [0, 0, 1, 1], [], []>} : vector<8x8xf32>, vector<8x32xf32>, vector<8x32xf32> -> vector<8x32xf32>
    %38 = arith.addf %19, %37 : vector<8x32xf32>
    %39 = vector.extract_strided_slice %17 {offsets = [0, 8], sizes = [8, 8], strides = [1, 1]} : vector<8x96xf32> to vector<8x8xf32>
    %40 = vector.extract_strided_slice %17 {offsets = [0, 40], sizes = [8, 8], strides = [1, 1]} : vector<8x96xf32> to vector<8x8xf32>
    %41 = vector.extract_strided_slice %17 {offsets = [0, 72], sizes = [8, 8], strides = [1, 1]} : vector<8x96xf32> to vector<8x8xf32>
    %cst_12 = arith.constant dense<0.000000e+00> : vector<8x8xf32>
    %42 = tpu.matmul %39, %40, %cst_12 {dimension_numbers = #tpu.dot_dimension_numbers<[1], [1], [0], [0], [0, 0, 1, 0], [], []>} : vector<8x8xf32>, vector<8x8xf32>, vector<8x8xf32> -> vector<8x8xf32>
    %cst_13 = arith.constant dense<0xFF800000> : vector<8xf32>
    %43 = vector.multi_reduction <maximumf>, %42, %cst_13 [1] : vector<8x8xf32> to vector<8xf32>
    %44 = vector.shape_cast %43 : vector<8xf32> to vector<8x1xf32>
    %45 = vector.broadcast %44 : vector<8x1xf32> to vector<8x8xf32>
    %46 = arith.subf %42, %45 : vector<8x8xf32>
    %47 = math.exp %46 : vector<8x8xf32>
    %cst_14 = arith.constant dense<0.000000e+00> : vector<8xf32>
    %48 = vector.multi_reduction <add>, %47, %cst_14 [1] : vector<8x8xf32> to vector<8xf32>
    %49 = vector.shape_cast %48 : vector<8xf32> to vector<8x1xf32>
    %cst_15 = arith.constant dense<0.000000e+00> : vector<8x8xf32>
    %50 = tpu.matmul %47, %41, %cst_15 {dimension_numbers = #tpu.dot_dimension_numbers<[1], [0], [0], [1], [0, 0, 1, 1], [], []>} : vector<8x8xf32>, vector<8x8xf32>, vector<8x8xf32> -> vector<8x8xf32>
    %cst_16 = arith.constant 1.000000e+00 : f32
    %51 = vector.broadcast %cst_16 : f32 to vector<8x1xf32>
    %52 = arith.divf %51, %49 : vector<8x1xf32>
    %53 = vector.broadcast %52 : vector<8x1xf32> to vector<8x8xf32>
    %54 = arith.mulf %50, %53 : vector<8x8xf32>
    %55 = vector.extract_strided_slice %5 {offsets = [8, 0], sizes = [8, 32], strides = [1, 1]} : vector<32x32xf32> to vector<8x32xf32>
    %cst_17 = arith.constant dense<0.000000e+00> : vector<8x32xf32>
    %56 = tpu.matmul %54, %55, %cst_17 {dimension_numbers = #tpu.dot_dimension_numbers<[1], [0], [0], [1], [0, 0, 1, 1], [], []>} : vector<8x8xf32>, vector<8x32xf32>, vector<8x32xf32> -> vector<8x32xf32>
    %57 = arith.addf %38, %56 : vector<8x32xf32>
    %58 = vector.extract_strided_slice %17 {offsets = [0, 16], sizes = [8, 8], strides = [1, 1]} : vector<8x96xf32> to vector<8x8xf32>
    %59 = vector.extract_strided_slice %17 {offsets = [0, 48], sizes = [8, 8], strides = [1, 1]} : vector<8x96xf32> to vector<8x8xf32>
    %60 = vector.extract_strided_slice %17 {offsets = [0, 80], sizes = [8, 8], strides = [1, 1]} : vector<8x96xf32> to vector<8x8xf32>
    %cst_18 = arith.constant dense<0.000000e+00> : vector<8x8xf32>
    %61 = tpu.matmul %58, %59, %cst_18 {dimension_numbers = #tpu.dot_dimension_numbers<[1], [1], [0], [0], [0, 0, 1, 0], [], []>} : vector<8x8xf32>, vector<8x8xf32>, vector<8x8xf32> -> vector<8x8xf32>
    %cst_19 = arith.constant dense<0xFF800000> : vector<8xf32>
    %62 = vector.multi_reduction <maximumf>, %61, %cst_19 [1] : vector<8x8xf32> to vector<8xf32>
    %63 = vector.shape_cast %62 : vector<8xf32> to vector<8x1xf32>
    %64 = vector.broadcast %63 : vector<8x1xf32> to vector<8x8xf32>
    %65 = arith.subf %61, %64 : vector<8x8xf32>
    %66 = math.exp %65 : vector<8x8xf32>
    %cst_20 = arith.constant dense<0.000000e+00> : vector<8xf32>
    %67 = vector.multi_reduction <add>, %66, %cst_20 [1] : vector<8x8xf32> to vector<8xf32>
    %68 = vector.shape_cast %67 : vector<8xf32> to vector<8x1xf32>
    %cst_21 = arith.constant dense<0.000000e+00> : vector<8x8xf32>
    %69 = tpu.matmul %66, %60, %cst_21 {dimension_numbers = #tpu.dot_dimension_numbers<[1], [0], [0], [1], [0, 0, 1, 1], [], []>} : vector<8x8xf32>, vector<8x8xf32>, vector<8x8xf32> -> vector<8x8xf32>
    %cst_22 = arith.constant 1.000000e+00 : f32
    %70 = vector.broadcast %cst_22 : f32 to vector<8x1xf32>
    %71 = arith.divf %70, %68 : vector<8x1xf32>
    %72 = vector.broadcast %71 : vector<8x1xf32> to vector<8x8xf32>
    %73 = arith.mulf %69, %72 : vector<8x8xf32>
    %74 = vector.extract_strided_slice %5 {offsets = [16, 0], sizes = [8, 32], strides = [1, 1]} : vector<32x32xf32> to vector<8x32xf32>
    %cst_23 = arith.constant dense<0.000000e+00> : vector<8x32xf32>
    %75 = tpu.matmul %73, %74, %cst_23 {dimension_numbers = #tpu.dot_dimension_numbers<[1], [0], [0], [1], [0, 0, 1, 1], [], []>} : vector<8x8xf32>, vector<8x32xf32>, vector<8x32xf32> -> vector<8x32xf32>
    %76 = arith.addf %57, %75 : vector<8x32xf32>
    %77 = vector.extract_strided_slice %17 {offsets = [0, 24], sizes = [8, 8], strides = [1, 1]} : vector<8x96xf32> to vector<8x8xf32>
    %78 = vector.extract_strided_slice %17 {offsets = [0, 56], sizes = [8, 8], strides = [1, 1]} : vector<8x96xf32> to vector<8x8xf32>
    %79 = vector.extract_strided_slice %17 {offsets = [0, 88], sizes = [8, 8], strides = [1, 1]} : vector<8x96xf32> to vector<8x8xf32>
    %cst_24 = arith.constant dense<0.000000e+00> : vector<8x8xf32>
    %80 = tpu.matmul %77, %78, %cst_24 {dimension_numbers = #tpu.dot_dimension_numbers<[1], [1], [0], [0], [0, 0, 1, 0], [], []>} : vector<8x8xf32>, vector<8x8xf32>, vector<8x8xf32> -> vector<8x8xf32>
    %cst_25 = arith.constant dense<0xFF800000> : vector<8xf32>
    %81 = vector.multi_reduction <maximumf>, %80, %cst_25 [1] : vector<8x8xf32> to vector<8xf32>
    %82 = vector.shape_cast %81 : vector<8xf32> to vector<8x1xf32>
    %83 = vector.broadcast %82 : vector<8x1xf32> to vector<8x8xf32>
    %84 = arith.subf %80, %83 : vector<8x8xf32>
    %85 = math.exp %84 : vector<8x8xf32>
    %cst_26 = arith.constant dense<0.000000e+00> : vector<8xf32>
    %86 = vector.multi_reduction <add>, %85, %cst_26 [1] : vector<8x8xf32> to vector<8xf32>
    %87 = vector.shape_cast %86 : vector<8xf32> to vector<8x1xf32>
    %cst_27 = arith.constant dense<0.000000e+00> : vector<8x8xf32>
    %88 = tpu.matmul %85, %79, %cst_27 {dimension_numbers = #tpu.dot_dimension_numbers<[1], [0], [0], [1], [0, 0, 1, 1], [], []>} : vector<8x8xf32>, vector<8x8xf32>, vector<8x8xf32> -> vector<8x8xf32>
    %cst_28 = arith.constant 1.000000e+00 : f32
    %89 = vector.broadcast %cst_28 : f32 to vector<8x1xf32>
    %90 = arith.divf %89, %87 : vector<8x1xf32>
    %91 = vector.broadcast %90 : vector<8x1xf32> to vector<8x8xf32>
    %92 = arith.mulf %88, %91 : vector<8x8xf32>
    %93 = vector.extract_strided_slice %5 {offsets = [24, 0], sizes = [8, 32], strides = [1, 1]} : vector<32x32xf32> to vector<8x32xf32>
    %cst_29 = arith.constant dense<0.000000e+00> : vector<8x32xf32>
    %94 = tpu.matmul %92, %93, %cst_29 {dimension_numbers = #tpu.dot_dimension_numbers<[1], [0], [0], [1], [0, 0, 1, 1], [], []>} : vector<8x8xf32>, vector<8x32xf32>, vector<8x32xf32> -> vector<8x32xf32>
    %95 = arith.addf %76, %94 : vector<8x32xf32>
    %cst_30 = arith.constant dense<0.000000e+00> : vector<8xf32>
    %96 = vector.multi_reduction <add>, %95, %cst_30 [1] : vector<8x32xf32> to vector<8xf32>
    %97 = vector.shape_cast %96 : vector<8xf32> to vector<8x1xf32>
    %cst_31 = arith.constant 3.200000e+01 : f32
    %98 = vector.broadcast %cst_31 : f32 to vector<8x1xf32>
    %99 = arith.divf %97, %98 : vector<8x1xf32>
    %100 = vector.broadcast %99 : vector<8x1xf32> to vector<8x32xf32>
    %101 = arith.subf %95, %100 : vector<8x32xf32>
    %102 = vector.broadcast %99 : vector<8x1xf32> to vector<8x32xf32>
    %103 = arith.subf %95, %102 : vector<8x32xf32>
    %104 = arith.mulf %101, %103 : vector<8x32xf32>
    %cst_32 = arith.constant dense<0.000000e+00> : vector<8xf32>
    %105 = vector.multi_reduction <add>, %104, %cst_32 [1] : vector<8x32xf32> to vector<8xf32>
    %106 = vector.shape_cast %105 : vector<8xf32> to vector<8x1xf32>
    %cst_33 = arith.constant 3.200000e+01 : f32
    %107 = vector.broadcast %cst_33 : f32 to vector<8x1xf32>
    %108 = arith.divf %106, %107 : vector<8x1xf32>
    %109 = vector.broadcast %99 : vector<8x1xf32> to vector<8x32xf32>
    %110 = arith.subf %95, %109 : vector<8x32xf32>
    %cst_34 = arith.constant 9.99999974E-6 : f32
    %111 = vector.broadcast %cst_34 : f32 to vector<8x1xf32>
    %112 = arith.addf %108, %111 : vector<8x1xf32>
    %113 = math.rsqrt %112 : vector<8x1xf32>
    %114 = vector.broadcast %113 : vector<8x1xf32> to vector<8x32xf32>
    %115 = arith.mulf %110, %114 : vector<8x32xf32>
    %116 = vector.broadcast %10 : vector<1x32xf32> to vector<8x32xf32>
    %117 = arith.mulf %115, %116 : vector<8x32xf32>
    %118 = vector.broadcast %11 : vector<1x32xf32> to vector<8x32xf32>
    %119 = arith.addf %117, %118 : vector<8x32xf32>
    %cst_35 = arith.constant dense<0.000000e+00> : vector<8x64xf32>
    %120 = tpu.matmul %119, %6, %cst_35 {dimension_numbers = #tpu.dot_dimension_numbers<[1], [0], [0], [1], [0, 0, 1, 1], [], []>} : vector<8x32xf32>, vector<32x64xf32>, vector<8x64xf32> -> vector<8x64xf32>
    %121 = vector.broadcast %8 : vector<1x64xf32> to vector<8x64xf32>
    %122 = arith.addf %120, %121 : vector<8x64xf32>
    %cst_36 = arith.constant 0.000000e+00 : f32
    %123 = vector.broadcast %cst_36 : f32 to vector<8x64xf32>
    %124 = arith.maximumf %122, %123 : vector<8x64xf32>
    %c0_37 = arith.constant 0 : index
    %c0_38 = arith.constant 0 : index
    %125 = vector.load %arg3[%c0_37, %c0_38] : memref<64x32xf32, #tpu.memory_space<vmem>>, vector<64x32xf32>
    %cst_39 = arith.constant dense<0.000000e+00> : vector<8x32xf32>
    %126 = tpu.matmul %124, %125, %cst_39 {dimension_numbers = #tpu.dot_dimension_numbers<[1], [0], [0], [1], [0, 0, 1, 1], [], []>} : vector<8x64xf32>, vector<64x32xf32>, vector<8x32xf32> -> vector<8x32xf32>
    %127 = vector.broadcast %12 : vector<1x32xf32> to vector<8x32xf32>
    %128 = arith.addf %126, %127 : vector<8x32xf32>
    %129 = arith.addf %128, %119 : vector<8x32xf32>
    %cst_40 = arith.constant dense<0.000000e+00> : vector<8xf32>
    %130 = vector.multi_reduction <add>, %129, %cst_40 [1] : vector<8x32xf32> to vector<8xf32>
    %131 = vector.shape_cast %130 : vector<8xf32> to vector<8x1xf32>
    %cst_41 = arith.constant 3.200000e+01 : f32
    %132 = vector.broadcast %cst_41 : f32 to vector<8x1xf32>
    %133 = arith.divf %131, %132 : vector<8x1xf32>
    %134 = vector.broadcast %133 : vector<8x1xf32> to vector<8x32xf32>
    %135 = arith.subf %129, %134 : vector<8x32xf32>
    %136 = vector.broadcast %133 : vector<8x1xf32> to vector<8x32xf32>
    %137 = arith.subf %129, %136 : vector<8x32xf32>
    %138 = arith.mulf %135, %137 : vector<8x32xf32>
    %cst_42 = arith.constant dense<0.000000e+00> : vector<8xf32>
    %139 = vector.multi_reduction <add>, %138, %cst_42 [1] : vector<8x32xf32> to vector<8xf32>
    %140 = vector.shape_cast %139 : vector<8xf32> to vector<8x1xf32>
    %cst_43 = arith.constant 3.200000e+01 : f32
    %141 = vector.broadcast %cst_43 : f32 to vector<8x1xf32>
    %142 = arith.divf %140, %141 : vector<8x1xf32>
    %143 = vector.broadcast %133 : vector<8x1xf32> to vector<8x32xf32>
    %144 = arith.subf %129, %143 : vector<8x32xf32>
    %cst_44 = arith.constant 9.99999974E-6 : f32
    %145 = vector.broadcast %cst_44 : f32 to vector<8x1xf32>
    %146 = arith.addf %142, %145 : vector<8x1xf32>
    %147 = math.rsqrt %146 : vector<8x1xf32>
    %148 = vector.broadcast %147 : vector<8x1xf32> to vector<8x32xf32>
    %149 = arith.mulf %144, %148 : vector<8x32xf32>
    %150 = vector.broadcast %13 : vector<1x32xf32> to vector<8x32xf32>
    %151 = arith.mulf %149, %150 : vector<8x32xf32>
    %152 = vector.broadcast %14 : vector<1x32xf32> to vector<8x32xf32>
    %153 = arith.addf %151, %152 : vector<8x32xf32>
    %c0_45 = arith.constant 0 : index
    %c0_46 = arith.constant 0 : index
    %c0_47 = arith.constant 0 : index
    %154 = vector.load %arg5[%c0_45, %c0_46, %c0_47] : memref<1x8x32xf32, #tpu.memory_space<vmem>>, vector<1x8x32xf32>
    %155 = vector.shape_cast %154 : vector<1x8x32xf32> to vector<8x32xf32>
    %156 = vector.shape_cast %153 : vector<8x32xf32> to vector<1x8x32xf32>
    tpu.vector_store %arg5[%c0_45, %c0_46, %c0_47], %156 {strides = array<i32>} : memref<1x8x32xf32, #tpu.memory_space<vmem>>, vector<1x8x32xf32>,
    return
  }
  func.func @transform_0(%arg0: i32) -> (i32, i32, i32) {
    %c0_i32 = arith.constant 0 : i32
    %c0_i32_0 = arith.constant 0 : i32
    %c0_i32_1 = arith.constant 0 : i32
    return %arg0, %c0_i32, %c0_i32_0 : i32, i32, i32
  }
  func.func @transform_1(%arg0: i32) -> (i32, i32) {
    %c0_i32 = arith.constant 0 : i32
    %c0_i32_0 = arith.constant 0 : i32
    %c0_i32_1 = arith.constant 0 : i32
    return %c0_i32, %c0_i32_0 : i32, i32
  }
  func.func @transform_2(%arg0: i32) -> (i32, i32) {
    %c0_i32 = arith.constant 0 : i32
    %c0_i32_0 = arith.constant 0 : i32
    %c0_i32_1 = arith.constant 0 : i32
    return %c0_i32, %c0_i32_0 : i32, i32
  }
  func.func @transform_3(%arg0: i32) -> (i32, i32) {
    %c0_i32 = arith.constant 0 : i32
    %c0_i32_0 = arith.constant 0 : i32
    %c0_i32_1 = arith.constant 0 : i32
    return %c0_i32, %c0_i32_0 : i32, i32
  }
  func.func @transform_4(%arg0: i32) -> (i32, i32, i32) {
    %c0_i32 = arith.constant 0 : i32
    %c0_i32_0 = arith.constant 0 : i32
    %c0_i32_1 = arith.constant 0 : i32
    return %arg0, %c0_i32, %c0_i32_0 : i32, i32, i32
  }
}

</mosaic_0001>

<llo_original>
// kernel: tpu_custom_call.1
$region0: #{tpu_custom_call.1}
  #allocation0 [shape = 'u32[]', space=smem, size = 0x4, offset = 0x4, fixed_abs, tag = 'smem constant byte address 0x4 - core index']
  #allocation1 [shape = 'u32[144,128]{1,0:T(1,128)}', space=vmem, size = 0x12000, scoped, tag = 'internal scratch']
  %s0 = inlined_call_operand.vmem [shape: f32[2,8,32], index: 0, kind: input, shape index: {}]
  %s1 = inlined_call_operand.vmem [shape: f32[32,192], index: 1, kind: input, shape index: {}]
  %s2 = inlined_call_operand.vmem [shape: f32[64,32], index: 2, kind: input, shape index: {}]
  %s3 = inlined_call_operand.vmem [shape: f32[8,128], index: 3, kind: input, shape index: {}]
  %s4 = inlined_call_operand.hbm [shape: f32[2,8,32], index: 4, kind: output, shape index: {}]
  %s5 = sld [smem:[#allocation0]]
  $region49: #{tpu_custom_call.1} parent=0
    _
  %s7 = ssub.s32 1, %s5
  %s8 = scalar_select 0, %s7, %s5
  $region1: #{tpu_custom_call.1} parent=0
    #allocation2 [shape = 'u8[8192]{0}', space=vmem, size = 0x2000, scoped, tag = 'output window, operand 0']
    #allocation3 [shape = 's32[2]{0}', space=sflag, size = 0x8, scoped, tag = 'scoped memory for tpu_custom_call.1']
    %9 = vsyncpa [#allocation3], 0
    %s10 = scalar_lea.sflag [#allocation3], 1
    %11 = vsyncpa %s10, 0
    loop: start=0, step=1, limit=4
    $region2: #{tpu_custom_call.1} parent=1 // loop_pre_header
      _
    $region3: #{tpu_custom_call.1} parent=1 // loop_header
      %s13 = sphi 0, %s17
      %p14 = scmp.ge.s32.totalorder %s13, 4
      %s23 = sphi 0, %s25
      %s26 = sphi 0, %s23
      %s27 = sphi 0, %s26
      %s43 = sphi 0, %s27
      %s47 = sphi 0, %s47
      %s49 = sphi 0, %s47
      %s50 = sphi 0, %s49
      %s64 = sphi 0, %s50
      %s68 = sphi 0, %s68
      %s70 = sphi 0, %s68
      %s71 = sphi 0, %s70
      %s85 = sphi 0, %s71
      %s89 = sphi 0, %s89
      %s91 = sphi 0, %s89
      %s92 = sphi 0, %s91
      %s106 = sphi 0, %s92
      %s112 = sphi 0, %s114
      %s115 = sphi 0, %s112
      %s116 = sphi 0, %s115
      %s132 = sphi 0, %s116
    $region4: #{tpu_custom_call.1} parent=1 // loop_header_branch
      %16 = sbr.rel (%p14) target = $region8
    $region5: #{tpu_custom_call.1} parent=1 // loop_body
      %s18 = ssub.s32 %s13, 1
      %s19 = ssub.s32 %s13, 2
      %s20 = sadd.s32 %s13, 1
      %s21 = ssub.s32 %s13, %s20
      %p22 = scmp.eq.s32.totalorder %s21, 0
      %s24 = sadd.s32 %s23, 1
      %s25 = scalar_select %p22, %s23, %s24
      %p28 = pneg %p22
      %p29 = scmp.eq.s32.totalorder %s13, 1
      %p30 = por %p28, %p29
      %p31 = scmp.ne.s32.totalorder %s23, %s26
      %p32 = scmp.eq.s32.totalorder %s13, 0
      %p33 = por %p31, %p32
      %p34 = scmp.ne.s32.totalorder %s23, %s26
      %p35 = scmp.eq.s32.totalorder %s18, 1
      %p36 = por %p34, %p35
      %p37 = scmp.ne.s32.totalorder %s26, %s27
      %p38 = scmp.eq.s32.totalorder %s18, 0
      %p39 = por %p37, %p38
      %p40 = scmp.ne.s32.totalorder %s26, %s27
      %p41 = scmp.eq.s32.totalorder %s19, 1
      %p42 = por %p40, %p41
      %p44 = scmp.ne.s32.totalorder %s27, %s43
      %p45 = scmp.eq.s32.totalorder %s19, 0
      %p46 = por %p44, %p45
      %s48 = sadd.s32 %s47, 1
      %p51 = scmp.eq.s32.totalorder %s13, 1
      %p52 = scmp.ne.s32.totalorder %s47, %s49
      %p53 = scmp.eq.s32.totalorder %s13, 0
      %p54 = por %p52, %p53
      %p55 = scmp.ne.s32.totalorder %s47, %s49
      %p56 = scmp.eq.s32.totalorder %s18, 1
      %p57 = por %p55, %p56
      %p58 = scmp.ne.s32.totalorder %s49, %s50
      %p59 = scmp.eq.s32.totalorder %s18, 0
      %p60 = por %p58, %p59
      %p61 = scmp.ne.s32.totalorder %s49, %s50
      %p62 = scmp.eq.s32.totalorder %s19, 1
      %p63 = por %p61, %p62
      %p65 = scmp.ne.s32.totalorder %s50, %s64
      %p66 = scmp.eq.s32.totalorder %s19, 0
      %p67 = por %p65, %p66
      %s69 = sadd.s32 %s68, 1
      %p72 = scmp.eq.s32.totalorder %s13, 1
      %p73 = scmp.ne.s32.totalorder %s68, %s70
      %p74 = scmp.eq.s32.totalorder %s13, 0
      %p75 = por %p73, %p74
      %p76 = scmp.ne.s32.totalorder %s68, %s70
      %p77 = scmp.eq.s32.totalorder %s18, 1
      %p78 = por %p76, %p77
      %p79 = scmp.ne.s32.totalorder %s70, %s71
      %p80 = scmp.eq.s32.totalorder %s18, 0
      %p81 = por %p79, %p80
      %p82 = scmp.ne.s32.totalorder %s70, %s71
      %p83 = scmp.eq.s32.totalorder %s19, 1
      %p84 = por %p82, %p83
      %p86 = scmp.ne.s32.totalorder %s71, %s85
      %p87 = scmp.eq.s32.totalorder %s19, 0
      %p88 = por %p86, %p87
      %s90 = sadd.s32 %s89, 1
      %p93 = scmp.eq.s32.totalorder %s13, 1
      %p94 = scmp.ne.s32.totalorder %s89, %s91
      %p95 = scmp.eq.s32.totalorder %s13, 0
      %p96 = por %p94, %p95
      %p97 = scmp.ne.s32.totalorder %s89, %s91
      %p98 = scmp.eq.s32.totalorder %s18, 1
      %p99 = por %p97, %p98
      %p100 = scmp.ne.s32.totalorder %s91, %s92
      %p101 = scmp.eq.s32.totalorder %s18, 0
      %p102 = por %p100, %p101
      %p103 = scmp.ne.s32.totalorder %s91, %s92
      %p104 = scmp.eq.s32.totalorder %s19, 1
      %p105 = por %p103, %p104
      %p107 = scmp.ne.s32.totalorder %s92, %s106
      %p108 = scmp.eq.s32.totalorder %s19, 0
      %p109 = por %p107, %p108
      %s110 = ssub.s32 %s13, %s20
      %p111 = scmp.eq.s32.totalorder %s110, 0
      %s113 = sadd.s32 %s112, 1
      %s114 = scalar_select %p111, %s112, %s113
      %p117 = pneg %p111
      %p118 = scmp.eq.s32.totalorder %s13, 1
      %p119 = por %p117, %p118
      %p120 = scmp.ne.s32.totalorder %s112, %s115
      %p121 = scmp.eq.s32.totalorder %s13, 0
      %p122 = por %p120, %p121
      %p123 = scmp.ne.s32.totalorder %s112, %s115
      %p124 = scmp.eq.s32.totalorder %s18, 1
      %p125 = por %p123, %p124
      %p126 = scmp.ne.s32.totalorder %s115, %s116
      %p127 = scmp.eq.s32.totalorder %s18, 0
      %p128 = por %p126, %p127
      %p129 = scmp.ne.s32.totalorder %s115, %s116
      %p130 = scmp.eq.s32.totalorder %s19, 1
      %p131 = por %p129, %p130
      %p133 = scmp.ne.s32.totalorder %s116, %s132
      %p134 = scmp.eq.s32.totalorder %s19, 0
      %p135 = por %p133, %p134
      %p136 = scmp.le.s32.totalorder 1, %s13
      %p137 = scmp.lt.s32.totalorder %s13, 3
      %p138 = pnand %p136, %p137
      %p139 = pneg %p138
      // Predicated region
      $region9: #{tpu_custom_call.1} parent=5 // pred_check
        _
      $region10: #{tpu_custom_call.1} parent=5 // pred_check_branch
        %141 = sbr.rel (%p138) target = $region12
      $region11: #{tpu_custom_call.1} parent=5 // pred_region
        %s142 = ssub.s32 %s13, 1
        // Predicated region
        $region13: #{tpu_custom_call.1} parent=11 // pred_check
          %p143 = pneg %p60
        $region14: #{tpu_custom_call.1} parent=11 // pred_check_branch
          %145 = sbr.rel (%p143) target = $region16
        $region15: #{tpu_custom_call.1} parent=11 // pred_region
          _
        $region16: #{tpu_custom_call.1} parent=11 // pred_fallthru
          _
        // Predicated region
        $region17: #{tpu_custom_call.1} parent=11 // pred_check
          %p146 = pneg %p81
        $region18: #{tpu_custom_call.1} parent=11 // pred_check_branch
          %148 = sbr.rel (%p146) target = $region20
        $region19: #{tpu_custom_call.1} parent=11 // pred_region
          _
        $region20: #{tpu_custom_call.1} parent=11 // pred_fallthru
          _
        // Predicated region
        $region21: #{tpu_custom_call.1} parent=11 // pred_check
          %p149 = pneg %p102
        $region22: #{tpu_custom_call.1} parent=11 // pred_check_branch
          %151 = sbr.rel (%p149) target = $region24
        $region23: #{tpu_custom_call.1} parent=11 // pred_region
          _
        $region24: #{tpu_custom_call.1} parent=11 // pred_fallthru
          _
      $region12: #{tpu_custom_call.1} parent=5 // pred_fallthru
        _
      %p152 = scmp.lt.s32.totalorder %s13, 2
      // Predicated region
      $region25: #{tpu_custom_call.1} parent=5 // pred_check
        %p153 = pneg %p152
      $region26: #{tpu_custom_call.1} parent=5 // pred_check_branch
        %155 = sbr.rel (%p153) target = $region28
      $region27: #{tpu_custom_call.1} parent=5 // pred_region
        // Predicated region
        $region29: #{tpu_custom_call.1} parent=27 // pred_check
          %p156 = pneg %p33
        $region30: #{tpu_custom_call.1} parent=27 // pred_check_branch
          %158 = sbr.rel (%p156) target = $region32
        $region31: #{tpu_custom_call.1} parent=27 // pred_region
          %p159 = scmp.lt.s32.totalorder %s13, 1
          %s160 = scalar_select %p159, %s13, 1
          %s161 = smul.addr %s160, 8
          %s162 = scalar_lea.vmem %s0, %s161
        $region32: #{tpu_custom_call.1} parent=27 // pred_fallthru
          _
      $region28: #{tpu_custom_call.1} parent=5 // pred_fallthru
        _
      %p163 = scmp.le.s32.totalorder 1, %s13
      %p164 = scmp.lt.s32.totalorder %s13, 3
      %p165 = pnand %p163, %p164
      %p166 = pneg %p165
      // Predicated region
      $region33: #{tpu_custom_call.1} parent=5 // pred_check
        _
      $region34: #{tpu_custom_call.1} parent=5 // pred_check_branch
        %168 = sbr.rel (%p165) target = $region36
      $region35: #{tpu_custom_call.1} parent=5 // pred_region
        %s169 = ssub.s32 %s13, 1
        %p170 = scmp.lt.s32.totalorder %s18, 1
        %s171 = scalar_select %p170, %s18, 1
        %s172 = smul.addr %s171, 8
        %s173 = scalar_lea.vmem %s0, %s172
        %p174 = pneg %p39
        %p175 = pneg %p36
        %p176 = pneg %p60
        %p177 = pneg %p57
        %p178 = pneg %p81
        %p179 = pneg %p78
        %p180 = pneg %p102
        %p181 = pneg %p99
        %p182 = pneg %p128
        %p183 = pneg %p125
        %s184 = sand.u32 %s115, 1
        %s185 = scalar_lea.sflag [#allocation3], %s184
        %s186 = sand.u32 %s115, 1
        %s187 = smul.addr %s186, 8
        %s188 = scalar_lea.vmem [#allocation2], %s187
        %p189 = scmp.lt.s32.totalorder %s18, 1
        %s190 = scalar_select %p189, %s18, 1
        %s191 = smul.addr %s190, 8
        %s192 = scalar_lea.vmem %s0, %s191
        %v193 = vld [vmem:[%s192] sm:$0xff]
        %v194 = vld [vmem:[%s1] sm:$0xff]
        %v195 = vld [vmem:[%s1 + $0x8] sm:$0xff]
        %v196 = vld [vmem:[%s1 + $0x10] sm:$0xff]
        %v197 = vld [vmem:[%s1 + $0x18] sm:$0xff]
        %v198 = vld [vmem:[%s1 + $0x20] sm:$0xff]
        %v199 = vld [vmem:[%s1 + $0x28] sm:$0xff]
        %v200 = vld [vmem:[%s1 + $0x30] sm:$0xff]
        %v201 = vld [vmem:[%s1 + $0x38] sm:$0xff]
        %v202 = vld [vmem:[%s3] sm:$0xff]
        %v203 = vlaneseq
        %v204 = vshrl.u32 %v203, 7
        %v205 = vsub.s32 0, %v204
        %v206 = vrot.slane %v202, %v205
        %vm207 = vcmask 261120
        %v209 = vsel %vm207, %v193, 0
        %211 = vmatprep.subr.mxu0 0.0
        %212 = vmatpush1.msra.mxu0 %v194
        %213 = vmatprep.subr.mxu0 0.0
        %214 = vmatpush1.msra.mxu0 %v196
        %215 = vmatprep.subr.mxu0 0.0
        %216 = vmatpush1.msra.mxu0 %v198
        %217 = vmatprep.subr.mxu0 0.0
        %218 = vmatpush1.msra.mxu0 %v200
        %219 = vmatprep.subr.mxu0 0.0
        %220 = vmatpush1.msra.mxu0 0.0
        %221 = vmatprep.subr.mxu0 0.0
        %222 = vmatpush1.msra.mxu0 0.0
        %223 = vmatprep.subr.mxu0 0.0
        %224 = vmatpush1.msra.mxu0 0.0
        %225 = vmatprep.subr.mxu0 0.0
        %226 = vmatpush1.msra.mxu0 0.0
        %227 = vmatprep.subr.mxu0 0.0
        %228 = vmatpush1.msra.mxu0 0.0
        %229 = vmatprep.subr.mxu0 0.0
        %230 = vmatpush1.msra.mxu0 0.0
        %231 = vmatprep.subr.mxu0 0.0
        %232 = vmatpush1.msra.mxu0 0.0
        %233 = vmatprep.subr.mxu0 0.0
        %234 = vmatpush1.msra.mxu0 0.0
        %235 = vmatprep.subr.mxu0 0.0
        %236 = vmatpush1.msra.mxu0 0.0
        %237 = vmatprep.subr.mxu0 0.0
        %238 = vmatpush1.msra.mxu0 0.0
        %239 = vmatprep.subr.mxu0 0.0
        %240 = vmatpush1.msra.mxu0 0.0
        %241 = vmatprep.subr.mxu0 0.0
        %242 = vmatpush1.msra.mxu0 0.0
        %243 = vmatprep.subr.mxu0 0.0
        %244 = vmatpush1.msra.mxu0 0.0
        %245 = vmatprep.subr.mxu0 0.0
        %246 = vmatpush1.msra.mxu0 0.0
        %247 = vmatprep.subr.mxu0 0.0
        %248 = vmatpush1.msra.mxu0 0.0
        %249 = vmatprep.subr.mxu0 0.0
        %250 = vmatpush1.msra.mxu0 0.0
        %251 = vmatprep.subr.mxu0 0.0
        %252 = vmatpush1.msra.mxu0 0.0
        %253 = vmatprep.subr.mxu0 0.0
        %254 = vmatpush1.msra.mxu0 0.0
        %255 = vmatprep.subr.mxu0 0.0
        %256 = vmatpush1.msra.mxu0 0.0
        %257 = vmatprep.subr.mxu0 0.0
        %258 = vmatpush1.msra.mxu0 0.0
        %259 = vmatprep.subr.mxu0 0.0
        %260 = vmatpush1.msra.mxu0 0.0
        %261 = vmatprep.subr.mxu0 0.0
        %262 = vmatpush1.msra.mxu0 0.0
        %263 = vmatprep.subr.mxu0 0.0
        %264 = vmatpush1.msra.mxu0 0.0
        %265 = vmatprep.subr.mxu0 0.0
        %266 = vmatpush1.msra.mxu0 0.0
        %267 = vmatprep.subr.mxu0 0.0
        %268 = vmatpush1.msra.mxu0 0.0
        %269 = vmatprep.subr.mxu0 0.0
        %270 = vmatpush1.msra.mxu0 0.0
        %271 = vmatprep.subr.mxu0 0.0
        %272 = vmatpush1.msra.mxu0 0.0
        %273 = vmatprep.subr.mxu0 0.0
        %274 = vmatpush1.msra.mxu0 0.0
        %275 = vmatprep.mubr.f32.mxu0 0.0
        %276 = vmatmul.mubr.f32.gmra.mrb[0].mxu0 %v209
        %v277 = vpop.f32.mrb[0].mxu0
        %v278 = vadd.f32 %v206, %v277
        %v279 = vpop.f32.mrb[0].mxu0
        %280 = vdwg.mxu0
        %v281 = vlaneseq
        %v282 = vshrl.u32 %v281, 7
        %v283 = vsub.s32 2, %v282
        %v284 = vrot.slane %v202, %v283
        %v285 = vadd.f32 %v193, %v284
        %287 = vrot.lane.b32.xlu0 %v278, 96
        %v288 = vpop.permute.xlu0 %287
        %vm289 = vcmask 64512
        %v290 = vsel %vm289, %v278, 0
        %v292 = vsel %vm289, %v288, 0
        %294 = vmatprep.subr.mxu0 0.0
        %295 = vmatpush1.xpose.msra.mxu0 %v292
        %296 = vmatprep.subr.mxu0 0.0
        %297 = vmatpush1.xpose.msra.mxu0 0.0
        %298 = vmatprep.subr.mxu0 0.0
        %299 = vmatpush1.xpose.msra.mxu0 0.0
        %300 = vmatprep.subr.mxu0 0.0
        %301 = vmatpush1.xpose.msra.mxu0 0.0
        %302 = vmatprep.subr.mxu0 0.0
        %303 = vmatpush1.xpose.msra.mxu0 0.0
        %304 = vmatprep.subr.mxu0 0.0
        %305 = vmatpush1.xpose.msra.mxu0 0.0
        %306 = vmatprep.subr.mxu0 0.0
        %307 = vmatpush1.xpose.msra.mxu0 0.0
        %308 = vmatprep.subr.mxu0 0.0
        %309 = vmatpush1.xpose.msra.mxu0 0.0
        %310 = vmatprep.subr.mxu0 0.0
        %311 = vmatpush1.xpose.msra.mxu0 0.0
        %312 = vmatprep.subr.mxu0 0.0
        %313 = vmatpush1.xpose.msra.mxu0 0.0
        %314 = vmatprep.subr.mxu0 0.0
        %315 = vmatpush1.xpose.msra.mxu0 0.0
        %316 = vmatprep.subr.mxu0 0.0
        %317 = vmatpush1.xpose.msra.mxu0 0.0
        %318 = vmatprep.subr.mxu0 0.0
        %319 = vmatpush1.xpose.msra.mxu0 0.0
        %320 = vmatprep.subr.mxu0 0.0
        %321 = vmatpush1.xpose.msra.mxu0 0.0
        %322 = vmatprep.subr.mxu0 0.0
        %323 = vmatpush1.xpose.msra.mxu0 0.0
        %324 = vmatprep.subr.mxu0 0.0
        %325 = vmatpush1.xpose.msra.mxu0 0.0
        %326 = vmatprep.subr.mxu0 0.0
        %327 = vmatpush1.xpose.msra.mxu0 0.0
        %328 = vmatprep.subr.mxu0 0.0
        %329 = vmatpush1.xpose.msra.mxu0 0.0
        %330 = vmatprep.subr.mxu0 0.0
        %331 = vmatpush1.xpose.msra.mxu0 0.0
        %332 = vmatprep.subr.mxu0 0.0
        %333 = vmatpush1.xpose.msra.mxu0 0.0
        %334 = vmatprep.subr.mxu0 0.0
        %335 = vmatpush1.xpose.msra.mxu0 0.0
        %336 = vmatprep.subr.mxu0 0.0
        %337 = vmatpush1.xpose.msra.mxu0 0.0
        %338 = vmatprep.subr.mxu0 0.0
        %339 = vmatpush1.xpose.msra.mxu0 0.0
        %340 = vmatprep.subr.mxu0 0.0
        %341 = vmatpush1.xpose.msra.mxu0 0.0
        %342 = vmatprep.subr.mxu0 0.0
        %343 = vmatpush1.xpose.msra.mxu0 0.0
        %344 = vmatprep.subr.mxu0 0.0
        %345 = vmatpush1.xpose.msra.mxu0 0.0
        %346 = vmatprep.subr.mxu0 0.0
        %347 = vmatpush1.xpose.msra.mxu0 0.0
        %348 = vmatprep.subr.mxu0 0.0
        %349 = vmatpush1.xpose.msra.mxu0 0.0
        %350 = vmatprep.subr.mxu0 0.0
        %351 = vmatpush1.xpose.msra.mxu0 0.0
        %352 = vmatprep.subr.mxu0 0.0
        %353 = vmatpush1.xpose.msra.mxu0 0.0
        %354 = vmatprep.subr.mxu0 0.0
        %355 = vmatpush1.xpose.msra.mxu0 0.0
        %356 = vmatprep.subr.mxu0 0.0
        %357 = vmatpush1.xpose.msra.mxu0 0.0
        %358 = vmatprep.mubr.f32.mxu0 0.0
        %359 = vmatmul.mubr.f32.gmra.mrb[0].mxu0 %v290
        %v360 = vpop.f32.mrb[0].mxu0
        %v361 = vadd.f32 0.0, %v360
        %v362 = vpop.f32.mrb[0].mxu0
        %363 = vdwg.mxu0
        %v364 = vsel %vm289, %v361, -inf
        %365 = vmax.xlane.f32.xlu0 %v364
        %v366 = vpop.xlane.xlu0 %365
        %v367 = vsub.f32 %v361, %v366
        %v368 = vmul.f32 %v367, 1.442695
        %v369 = vpow.pop %v368
        %v370 = vsel %vm289, %v369, 0.0
        %371 = vadd.xlane.f32.xlu0 %v370
        %v372 = vpop.xlane.xlu0 %371
        %373 = vrot.lane.b32.xlu0 %v278, 64
        %v374 = vpop.permute.xlu0 %373
        %v377 = vsel %vm289, %v369, 0
        %379 = vmatprep.subr.mxu0 0.0
        %380 = vmatpush1.msra.mxu0 %v374
        %381 = vmatprep.subr.mxu0 0.0
        %382 = vmatpush1.msra.mxu0 0.0
        %383 = vmatprep.subr.mxu0 0.0
        %384 = vmatpush1.msra.mxu0 0.0
        %385 = vmatprep.subr.mxu0 0.0
        %386 = vmatpush1.msra.mxu0 0.0
        %387 = vmatprep.subr.mxu0 0.0
        %388 = vmatpush1.msra.mxu0 0.0
        %389 = vmatprep.subr.mxu0 0.0
        %390 = vmatpush1.msra.mxu0 0.0
        %391 = vmatprep.subr.mxu0 0.0
        %392 = vmatpush1.msra.mxu0 0.0
        %393 = vmatprep.subr.mxu0 0.0
        %394 = vmatpush1.msra.mxu0 0.0
        %395 = vmatprep.subr.mxu0 0.0
        %396 = vmatpush1.msra.mxu0 0.0
        %397 = vmatprep.subr.mxu0 0.0
        %398 = vmatpush1.msra.mxu0 0.0
        %399 = vmatprep.subr.mxu0 0.0
        %400 = vmatpush1.msra.mxu0 0.0
        %401 = vmatprep.subr.mxu0 0.0
        %402 = vmatpush1.msra.mxu0 0.0
        %403 = vmatprep.subr.mxu0 0.0
        %404 = vmatpush1.msra.mxu0 0.0
        %405 = vmatprep.subr.mxu0 0.0
        %406 = vmatpush1.msra.mxu0 0.0
        %407 = vmatprep.subr.mxu0 0.0
        %408 = vmatpush1.msra.mxu0 0.0
        %409 = vmatprep.subr.mxu0 0.0
        %410 = vmatpush1.msra.mxu0 0.0
        %411 = vmatprep.subr.mxu0 0.0
        %412 = vmatpush1.msra.mxu0 0.0
        %413 = vmatprep.subr.mxu0 0.0
        %414 = vmatpush1.msra.mxu0 0.0
        %415 = vmatprep.subr.mxu0 0.0
        %416 = vmatpush1.msra.mxu0 0.0
        %417 = vmatprep.subr.mxu0 0.0
        %418 = vmatpush1.msra.mxu0 0.0
        %419 = vmatprep.subr.mxu0 0.0
        %420 = vmatpush1.msra.mxu0 0.0
        %421 = vmatprep.subr.mxu0 0.0
        %422 = vmatpush1.msra.mxu0 0.0
        %423 = vmatprep.subr.mxu0 0.0
        %424 = vmatpush1.msra.mxu0 0.0
        %425 = vmatprep.subr.mxu0 0.0
        %426 = vmatpush1.msra.mxu0 0.0
        %427 = vmatprep.subr.mxu0 0.0
        %428 = vmatpush1.msra.mxu0 0.0
        %429 = vmatprep.subr.mxu0 0.0
        %430 = vmatpush1.msra.mxu0 0.0
        %431 = vmatprep.subr.mxu0 0.0
        %432 = vmatpush1.msra.mxu0 0.0
        %433 = vmatprep.subr.mxu0 0.0
        %434 = vmatpush1.msra.mxu0 0.0
        %435 = vmatprep.subr.mxu0 0.0
        %436 = vmatpush1.msra.mxu0 0.0
        %437 = vmatprep.subr.mxu0 0.0
        %438 = vmatpush1.msra.mxu0 0.0
        %439 = vmatprep.subr.mxu0 0.0
        %440 = vmatpush1.msra.mxu0 0.0
        %441 = vmatprep.subr.mxu0 0.0
        %442 = vmatpush1.msra.mxu0 0.0
        %443 = vmatprep.mubr.f32.mxu0 0.0
        %444 = vmatmul.mubr.f32.gmra.mrb[0].mxu0 %v377
        %v445 = vpop.f32.mrb[0].mxu0
        %v446 = vadd.f32 0.0, %v445
        %v447 = vpop.f32.mrb[0].mxu0
        %448 = vdwg.mxu0
        %v449 = vrcp.pop %v372
        %v450 = vmul.f32 1.0, %v449
        %v451 = vmul.f32 %v446, %v450
        %453 = vrot.lane.b32.xlu0 %v194, 32
        %v454 = vpop.permute.xlu0 %453
        %v457 = vsel %vm289, %v451, 0
        %459 = vmatprep.subr.mxu0 0.0
        %460 = vmatpush1.msra.mxu0 %v454
        %461 = vmatprep.subr.mxu0 0.0
        %462 = vmatpush1.msra.mxu0 0.0
        %463 = vmatprep.subr.mxu0 0.0
        %464 = vmatpush1.msra.mxu0 0.0
        %465 = vmatprep.subr.mxu0 0.0
        %466 = vmatpush1.msra.mxu0 0.0
        %467 = vmatprep.subr.mxu0 0.0
        %468 = vmatpush1.msra.mxu0 0.0
        %469 = vmatprep.subr.mxu0 0.0
        %470 = vmatpush1.msra.mxu0 0.0
        %471 = vmatprep.subr.mxu0 0.0
        %472 = vmatpush1.msra.mxu0 0.0
        %473 = vmatprep.subr.mxu0 0.0
        %474 = vmatpush1.msra.mxu0 0.0
        %475 = vmatprep.subr.mxu0 0.0
        %476 = vmatpush1.msra.mxu0 0.0
        %477 = vmatprep.subr.mxu0 0.0
        %478 = vmatpush1.msra.mxu0 0.0
        %479 = vmatprep.subr.mxu0 0.0
        %480 = vmatpush1.msra.mxu0 0.0
        %481 = vmatprep.subr.mxu0 0.0
        %482 = vmatpush1.msra.mxu0 0.0
        %483 = vmatprep.subr.mxu0 0.0
        %484 = vmatpush1.msra.mxu0 0.0
        %485 = vmatprep.subr.mxu0 0.0
        %486 = vmatpush1.msra.mxu0 0.0
        %487 = vmatprep.subr.mxu0 0.0
        %488 = vmatpush1.msra.mxu0 0.0
        %489 = vmatprep.subr.mxu0 0.0
        %490 = vmatpush1.msra.mxu0 0.0
        %491 = vmatprep.subr.mxu0 0.0
        %492 = vmatpush1.msra.mxu0 0.0
        %493 = vmatprep.subr.mxu0 0.0
        %494 = vmatpush1.msra.mxu0 0.0
        %495 = vmatprep.subr.mxu0 0.0
        %496 = vmatpush1.msra.mxu0 0.0
        %497 = vmatprep.subr.mxu0 0.0
        %498 = vmatpush1.msra.mxu0 0.0
        %499 = vmatprep.subr.mxu0 0.0
        %500 = vmatpush1.msra.mxu0 0.0
        %501 = vmatprep.subr.mxu0 0.0
        %502 = vmatpush1.msra.mxu0 0.0
        %503 = vmatprep.subr.mxu0 0.0
        %504 = vmatpush1.msra.mxu0 0.0
        %505 = vmatprep.subr.mxu0 0.0
        %506 = vmatpush1.msra.mxu0 0.0
        %507 = vmatprep.subr.mxu0 0.0
        %508 = vmatpush1.msra.mxu0 0.0
        %509 = vmatprep.subr.mxu0 0.0
        %510 = vmatpush1.msra.mxu0 0.0
        %511 = vmatprep.subr.mxu0 0.0
        %512 = vmatpush1.msra.mxu0 0.0
        %513 = vmatprep.subr.mxu0 0.0
        %514 = vmatpush1.msra.mxu0 0.0
        %515 = vmatprep.subr.mxu0 0.0
        %516 = vmatpush1.msra.mxu0 0.0
        %517 = vmatprep.subr.mxu0 0.0
        %518 = vmatpush1.msra.mxu0 0.0
        %519 = vmatprep.subr.mxu0 0.0
        %520 = vmatpush1.msra.mxu0 0.0
        %521 = vmatprep.subr.mxu0 0.0
        %522 = vmatpush1.msra.mxu0 0.0
        %523 = vmatprep.mubr.f32.mxu0 0.0
        %524 = vmatmul.mubr.f32.gmra.mrb[0].mxu0 %v457
        %v525 = vpop.f32.mrb[0].mxu0
        %v526 = vadd.f32 0.0, %v525
        %v527 = vpop.f32.mrb[0].mxu0
        %528 = vdwg.mxu0
        %v529 = vadd.f32 %v285, %v526
        %530 = vrot.lane.b32.xlu0 %v278, 120
        %v531 = vpop.permute.xlu0 %530
        %532 = vrot.lane.b32.xlu0 %v278, 88
        %v533 = vpop.permute.xlu0 %532
        %v534 = vsel %vm289, %v531, 0
        %v536 = vsel %vm289, %v533, 0
        %538 = vmatprep.subr.mxu0 0.0
        %539 = vmatpush1.xpose.msra.mxu0 %v536
        %540 = vmatprep.subr.mxu0 0.0
        %541 = vmatpush1.xpose.msra.mxu0 0.0
        %542 = vmatprep.subr.mxu0 0.0
        %543 = vmatpush1.xpose.msra.mxu0 0.0
        %544 = vmatprep.subr.mxu0 0.0
        %545 = vmatpush1.xpose.msra.mxu0 0.0
        %546 = vmatprep.subr.mxu0 0.0
        %547 = vmatpush1.xpose.msra.mxu0 0.0
        %548 = vmatprep.subr.mxu0 0.0
        %549 = vmatpush1.xpose.msra.mxu0 0.0
        %550 = vmatprep.subr.mxu0 0.0
        %551 = vmatpush1.xpose.msra.mxu0 0.0
        %552 = vmatprep.subr.mxu0 0.0
        %553 = vmatpush1.xpose.msra.mxu0 0.0
        %554 = vmatprep.subr.mxu0 0.0
        %555 = vmatpush1.xpose.msra.mxu0 0.0
        %556 = vmatprep.subr.mxu0 0.0
        %557 = vmatpush1.xpose.msra.mxu0 0.0
        %558 = vmatprep.subr.mxu0 0.0
        %559 = vmatpush1.xpose.msra.mxu0 0.0
        %560 = vmatprep.subr.mxu0 0.0
        %561 = vmatpush1.xpose.msra.mxu0 0.0
        %562 = vmatprep.subr.mxu0 0.0
        %563 = vmatpush1.xpose.msra.mxu0 0.0
        %564 = vmatprep.subr.mxu0 0.0
        %565 = vmatpush1.xpose.msra.mxu0 0.0
        %566 = vmatprep.subr.mxu0 0.0
        %567 = vmatpush1.xpose.msra.mxu0 0.0
        %568 = vmatprep.subr.mxu0 0.0
        %569 = vmatpush1.xpose.msra.mxu0 0.0
        %570 = vmatprep.subr.mxu0 0.0
        %571 = vmatpush1.xpose.msra.mxu0 0.0
        %572 = vmatprep.subr.mxu0 0.0
        %573 = vmatpush1.xpose.msra.mxu0 0.0
        %574 = vmatprep.subr.mxu0 0.0
        %575 = vmatpush1.xpose.msra.mxu0 0.0
        %576 = vmatprep.subr.mxu0 0.0
        %577 = vmatpush1.xpose.msra.mxu0 0.0
        %578 = vmatprep.subr.mxu0 0.0
        %579 = vmatpush1.xpose.msra.mxu0 0.0
        %580 = vmatprep.subr.mxu0 0.0
        %581 = vmatpush1.xpose.msra.mxu0 0.0
        %582 = vmatprep.subr.mxu0 0.0
        %583 = vmatpush1.xpose.msra.mxu0 0.0
        %584 = vmatprep.subr.mxu0 0.0
        %585 = vmatpush1.xpose.msra.mxu0 0.0
        %586 = vmatprep.subr.mxu0 0.0
        %587 = vmatpush1.xpose.msra.mxu0 0.0
        %588 = vmatprep.subr.mxu0 0.0
        %589 = vmatpush1.xpose.msra.mxu0 0.0
        %590 = vmatprep.subr.mxu0 0.0
        %591 = vmatpush1.xpose.msra.mxu0 0.0
        %592 = vmatprep.subr.mxu0 0.0
        %593 = vmatpush1.xpose.msra.mxu0 0.0
        %594 = vmatprep.subr.mxu0 0.0
        %595 = vmatpush1.xpose.msra.mxu0 0.0
        %596 = vmatprep.subr.mxu0 0.0
        %597 = vmatpush1.xpose.msra.mxu0 0.0
        %598 = vmatprep.subr.mxu0 0.0
        %599 = vmatpush1.xpose.msra.mxu0 0.0
        %600 = vmatprep.subr.mxu0 0.0
        %601 = vmatpush1.xpose.msra.mxu0 0.0
        %602 = vmatprep.mubr.f32.mxu0 0.0
        %603 = vmatmul.mubr.f32.gmra.mrb[0].mxu0 %v534
        %v604 = vpop.f32.mrb[0].mxu0
        %v605 = vadd.f32 0.0, %v604
        %v606 = vpop.f32.mrb[0].mxu0
        %607 = vdwg.mxu0
        %v608 = vsel %vm289, %v605, -inf
        %609 = vmax.xlane.f32.xlu0 %v608
        %v610 = vpop.xlane.xlu0 %609
        %v611 = vsub.f32 %v605, %v610
        %v612 = vmul.f32 %v611, 1.442695
        %v613 = vpow.pop %v612
        %v614 = vsel %vm289, %v613, 0.0
        %615 = vadd.xlane.f32.xlu0 %v614
        %v616 = vpop.xlane.xlu0 %615
        %617 = vrot.lane.b32.xlu0 %v278, 56
        %v618 = vpop.permute.xlu0 %617
        %v621 = vsel %vm289, %v613, 0
        %623 = vmatprep.subr.mxu0 0.0
        %624 = vmatpush1.msra.mxu0 %v618
        %625 = vmatprep.subr.mxu0 0.0
        %626 = vmatpush1.msra.mxu0 0.0
        %627 = vmatprep.subr.mxu0 0.0
        %628 = vmatpush1.msra.mxu0 0.0
        %629 = vmatprep.subr.mxu0 0.0
        %630 = vmatpush1.msra.mxu0 0.0
        %631 = vmatprep.subr.mxu0 0.0
        %632 = vmatpush1.msra.mxu0 0.0
        %633 = vmatprep.subr.mxu0 0.0
        %634 = vmatpush1.msra.mxu0 0.0
        %635 = vmatprep.subr.mxu0 0.0
        %636 = vmatpush1.msra.mxu0 0.0
        %637 = vmatprep.subr.mxu0 0.0
        %638 = vmatpush1.msra.mxu0 0.0
        %639 = vmatprep.subr.mxu0 0.0
        %640 = vmatpush1.msra.mxu0 0.0
        %641 = vmatprep.subr.mxu0 0.0
        %642 = vmatpush1.msra.mxu0 0.0
        %643 = vmatprep.subr.mxu0 0.0
        %644 = vmatpush1.msra.mxu0 0.0
        %645 = vmatprep.subr.mxu0 0.0
        %646 = vmatpush1.msra.mxu0 0.0
        %647 = vmatprep.subr.mxu0 0.0
        %648 = vmatpush1.msra.mxu0 0.0
        %649 = vmatprep.subr.mxu0 0.0
        %650 = vmatpush1.msra.mxu0 0.0
        %651 = vmatprep.subr.mxu0 0.0
        %652 = vmatpush1.msra.mxu0 0.0
        %653 = vmatprep.subr.mxu0 0.0
        %654 = vmatpush1.msra.mxu0 0.0
        %655 = vmatprep.subr.mxu0 0.0
        %656 = vmatpush1.msra.mxu0 0.0
        %657 = vmatprep.subr.mxu0 0.0
        %658 = vmatpush1.msra.mxu0 0.0
        %659 = vmatprep.subr.mxu0 0.0
        %660 = vmatpush1.msra.mxu0 0.0
        %661 = vmatprep.subr.mxu0 0.0
        %662 = vmatpush1.msra.mxu0 0.0
        %663 = vmatprep.subr.mxu0 0.0
        %664 = vmatpush1.msra.mxu0 0.0
        %665 = vmatprep.subr.mxu0 0.0
        %666 = vmatpush1.msra.mxu0 0.0
        %667 = vmatprep.subr.mxu0 0.0
        %668 = vmatpush1.msra.mxu0 0.0
        %669 = vmatprep.subr.mxu0 0.0
        %670 = vmatpush1.msra.mxu0 0.0
        %671 = vmatprep.subr.mxu0 0.0
        %672 = vmatpush1.msra.mxu0 0.0
        %673 = vmatprep.subr.mxu0 0.0
        %674 = vmatpush1.msra.mxu0 0.0
        %675 = vmatprep.subr.mxu0 0.0
        %676 = vmatpush1.msra.mxu0 0.0
        %677 = vmatprep.subr.mxu0 0.0
        %678 = vmatpush1.msra.mxu0 0.0
        %679 = vmatprep.subr.mxu0 0.0
        %680 = vmatpush1.msra.mxu0 0.0
        %681 = vmatprep.subr.mxu0 0.0
        %682 = vmatpush1.msra.mxu0 0.0
        %683 = vmatprep.subr.mxu0 0.0
        %684 = vmatpush1.msra.mxu0 0.0
        %685 = vmatprep.subr.mxu0 0.0
        %686 = vmatpush1.msra.mxu0 0.0
        %687 = vmatprep.mubr.f32.mxu0 0.0
        %688 = vmatmul.mubr.f32.gmra.mrb[0].mxu0 %v621
        %v689 = vpop.f32.mrb[0].mxu0
        %v690 = vadd.f32 0.0, %v689
        %v691 = vpop.f32.mrb[0].mxu0
        %692 = vdwg.mxu0
        %v693 = vrcp.pop %v616
        %v694 = vmul.f32 1.0, %v693
        %v695 = vmul.f32 %v690, %v694
        %697 = vrot.lane.b32.xlu0 %v196, 32
        %v698 = vpop.permute.xlu0 %697
        %v701 = vsel %vm289, %v695, 0
        %703 = vmatprep.subr.mxu0 0.0
        %704 = vmatpush1.msra.mxu0 %v698
        %705 = vmatprep.subr.mxu0 0.0
        %706 = vmatpush1.msra.mxu0 0.0
        %707 = vmatprep.subr.mxu0 0.0
        %708 = vmatpush1.msra.mxu0 0.0
        %709 = vmatprep.subr.mxu0 0.0
        %710 = vmatpush1.msra.mxu0 0.0
        %711 = vmatprep.subr.mxu0 0.0
        %712 = vmatpush1.msra.mxu0 0.0
        %713 = vmatprep.subr.mxu0 0.0
        %714 = vmatpush1.msra.mxu0 0.0
        %715 = vmatprep.subr.mxu0 0.0
        %716 = vmatpush1.msra.mxu0 0.0
        %717 = vmatprep.subr.mxu0 0.0
        %718 = vmatpush1.msra.mxu0 0.0
        %719 = vmatprep.subr.mxu0 0.0
        %720 = vmatpush1.msra.mxu0 0.0
        %721 = vmatprep.subr.mxu0 0.0
        %722 = vmatpush1.msra.mxu0 0.0
        %723 = vmatprep.subr.mxu0 0.0
        %724 = vmatpush1.msra.mxu0 0.0
        %725 = vmatprep.subr.mxu0 0.0
        %726 = vmatpush1.msra.mxu0 0.0
        %727 = vmatprep.subr.mxu0 0.0
        %728 = vmatpush1.msra.mxu0 0.0
        %729 = vmatprep.subr.mxu0 0.0
        %730 = vmatpush1.msra.mxu0 0.0
        %731 = vmatprep.subr.mxu0 0.0
        %732 = vmatpush1.msra.mxu0 0.0
        %733 = vmatprep.subr.mxu0 0.0
        %734 = vmatpush1.msra.mxu0 0.0
        %735 = vmatprep.subr.mxu0 0.0
        %736 = vmatpush1.msra.mxu0 0.0
        %737 = vmatprep.subr.mxu0 0.0
        %738 = vmatpush1.msra.mxu0 0.0
        %739 = vmatprep.subr.mxu0 0.0
        %740 = vmatpush1.msra.mxu0 0.0
        %741 = vmatprep.subr.mxu0 0.0
        %742 = vmatpush1.msra.mxu0 0.0
        %743 = vmatprep.subr.mxu0 0.0
        %744 = vmatpush1.msra.mxu0 0.0
        %745 = vmatprep.subr.mxu0 0.0
        %746 = vmatpush1.msra.mxu0 0.0
        %747 = vmatprep.subr.mxu0 0.0
        %748 = vmatpush1.msra.mxu0 0.0
        %749 = vmatprep.subr.mxu0 0.0
        %750 = vmatpush1.msra.mxu0 0.0
        %751 = vmatprep.subr.mxu0 0.0
        %752 = vmatpush1.msra.mxu0 0.0
        %753 = vmatprep.subr.mxu0 0.0
        %754 = vmatpush1.msra.mxu0 0.0
        %755 = vmatprep.subr.mxu0 0.0
        %756 = vmatpush1.msra.mxu0 0.0
        %757 = vmatprep.subr.mxu0 0.0
        %758 = vmatpush1.msra.mxu0 0.0
        %759 = vmatprep.subr.mxu0 0.0
        %760 = vmatpush1.msra.mxu0 0.0
        %761 = vmatprep.subr.mxu0 0.0
        %762 = vmatpush1.msra.mxu0 0.0
        %763 = vmatprep.subr.mxu0 0.0
        %764 = vmatpush1.msra.mxu0 0.0
        %765 = vmatprep.subr.mxu0 0.0
        %766 = vmatpush1.msra.mxu0 0.0
        %767 = vmatprep.mubr.f32.mxu0 0.0
        %768 = vmatmul.mubr.f32.gmra.mrb[0].mxu0 %v701
        %v769 = vpop.f32.mrb[0].mxu0
        %v770 = vadd.f32 0.0, %v769
        %v771 = vpop.f32.mrb[0].mxu0
        %772 = vdwg.mxu0
        %v773 = vadd.f32 %v529, %v770
        %774 = vrot.lane.b32.xlu0 %v278, 112
        %v775 = vpop.permute.xlu0 %774
        %776 = vrot.lane.b32.xlu0 %v278, 80
        %v777 = vpop.permute.xlu0 %776
        %v778 = vsel %vm289, %v775, 0
        %v780 = vsel %vm289, %v777, 0
        %782 = vmatprep.subr.mxu0 0.0
        %783 = vmatpush1.xpose.msra.mxu0 %v780
        %784 = vmatprep.subr.mxu0 0.0
        %785 = vmatpush1.xpose.msra.mxu0 0.0
        %786 = vmatprep.subr.mxu0 0.0
        %787 = vmatpush1.xpose.msra.mxu0 0.0
        %788 = vmatprep.subr.mxu0 0.0
        %789 = vmatpush1.xpose.msra.mxu0 0.0
        %790 = vmatprep.subr.mxu0 0.0
        %791 = vmatpush1.xpose.msra.mxu0 0.0
        %792 = vmatprep.subr.mxu0 0.0
        %793 = vmatpush1.xpose.msra.mxu0 0.0
        %794 = vmatprep.subr.mxu0 0.0
        %795 = vmatpush1.xpose.msra.mxu0 0.0
        %796 = vmatprep.subr.mxu0 0.0
        %797 = vmatpush1.xpose.msra.mxu0 0.0
        %798 = vmatprep.subr.mxu0 0.0
        %799 = vmatpush1.xpose.msra.mxu0 0.0
        %800 = vmatprep.subr.mxu0 0.0
        %801 = vmatpush1.xpose.msra.mxu0 0.0
        %802 = vmatprep.subr.mxu0 0.0
        %803 = vmatpush1.xpose.msra.mxu0 0.0
        %804 = vmatprep.subr.mxu0 0.0
        %805 = vmatpush1.xpose.msra.mxu0 0.0
        %806 = vmatprep.subr.mxu0 0.0
        %807 = vmatpush1.xpose.msra.mxu0 0.0
        %808 = vmatprep.subr.mxu0 0.0
        %809 = vmatpush1.xpose.msra.mxu0 0.0
        %810 = vmatprep.subr.mxu0 0.0
        %811 = vmatpush1.xpose.msra.mxu0 0.0
        %812 = vmatprep.subr.mxu0 0.0
        %813 = vmatpush1.xpose.msra.mxu0 0.0
        %814 = vmatprep.subr.mxu0 0.0
        %815 = vmatpush1.xpose.msra.mxu0 0.0
        %816 = vmatprep.subr.mxu0 0.0
        %817 = vmatpush1.xpose.msra.mxu0 0.0
        %818 = vmatprep.subr.mxu0 0.0
        %819 = vmatpush1.xpose.msra.mxu0 0.0
        %820 = vmatprep.subr.mxu0 0.0
        %821 = vmatpush1.xpose.msra.mxu0 0.0
        %822 = vmatprep.subr.mxu0 0.0
        %823 = vmatpush1.xpose.msra.mxu0 0.0
        %824 = vmatprep.subr.mxu0 0.0
        %825 = vmatpush1.xpose.msra.mxu0 0.0
        %826 = vmatprep.subr.mxu0 0.0
        %827 = vmatpush1.xpose.msra.mxu0 0.0
        %828 = vmatprep.subr.mxu0 0.0
        %829 = vmatpush1.xpose.msra.mxu0 0.0
        %830 = vmatprep.subr.mxu0 0.0
        %831 = vmatpush1.xpose.msra.mxu0 0.0
        %832 = vmatprep.subr.mxu0 0.0
        %833 = vmatpush1.xpose.msra.mxu0 0.0
        %834 = vmatprep.subr.mxu0 0.0
        %835 = vmatpush1.xpose.msra.mxu0 0.0
        %836 = vmatprep.subr.mxu0 0.0
        %837 = vmatpush1.xpose.msra.mxu0 0.0
        %838 = vmatprep.subr.mxu0 0.0
        %839 = vmatpush1.xpose.msra.mxu0 0.0
        %840 = vmatprep.subr.mxu0 0.0
        %841 = vmatpush1.xpose.msra.mxu0 0.0
        %842 = vmatprep.subr.mxu0 0.0
        %843 = vmatpush1.xpose.msra.mxu0 0.0
        %844 = vmatprep.subr.mxu0 0.0
        %845 = vmatpush1.xpose.msra.mxu0 0.0
        %846 = vmatprep.mubr.f32.mxu0 0.0
        %847 = vmatmul.mubr.f32.gmra.mrb[0].mxu0 %v778
        %v848 = vpop.f32.mrb[0].mxu0
        %v849 = vadd.f32 0.0, %v848
        %v850 = vpop.f32.mrb[0].mxu0
        %851 = vdwg.mxu0
        %v852 = vsel %vm289, %v849, -inf
        %853 = vmax.xlane.f32.xlu0 %v852
        %v854 = vpop.xlane.xlu0 %853
        %v855 = vsub.f32 %v849, %v854
        %v856 = vmul.f32 %v855, 1.442695
        %v857 = vpow.pop %v856
        %v858 = vsel %vm289, %v857, 0.0
        %859 = vadd.xlane.f32.xlu0 %v858
        %v860 = vpop.xlane.xlu0 %859
        %861 = vrot.lane.b32.xlu0 %v278, 48
        %v862 = vpop.permute.xlu0 %861
        %v865 = vsel %vm289, %v857, 0
        %867 = vmatprep.subr.mxu0 0.0
        %868 = vmatpush1.msra.mxu0 %v862
        %869 = vmatprep.subr.mxu0 0.0
        %870 = vmatpush1.msra.mxu0 0.0
        %871 = vmatprep.subr.mxu0 0.0
        %872 = vmatpush1.msra.mxu0 0.0
        %873 = vmatprep.subr.mxu0 0.0
        %874 = vmatpush1.msra.mxu0 0.0
        %875 = vmatprep.subr.mxu0 0.0
        %876 = vmatpush1.msra.mxu0 0.0
        %877 = vmatprep.subr.mxu0 0.0
        %878 = vmatpush1.msra.mxu0 0.0
        %879 = vmatprep.subr.mxu0 0.0
        %880 = vmatpush1.msra.mxu0 0.0
        %881 = vmatprep.subr.mxu0 0.0
        %882 = vmatpush1.msra.mxu0 0.0
        %883 = vmatprep.subr.mxu0 0.0
        %884 = vmatpush1.msra.mxu0 0.0
        %885 = vmatprep.subr.mxu0 0.0
        %886 = vmatpush1.msra.mxu0 0.0
        %887 = vmatprep.subr.mxu0 0.0
        %888 = vmatpush1.msra.mxu0 0.0
        %889 = vmatprep.subr.mxu0 0.0
        %890 = vmatpush1.msra.mxu0 0.0
        %891 = vmatprep.subr.mxu0 0.0
        %892 = vmatpush1.msra.mxu0 0.0
        %893 = vmatprep.subr.mxu0 0.0
        %894 = vmatpush1.msra.mxu0 0.0
        %895 = vmatprep.subr.mxu0 0.0
        %896 = vmatpush1.msra.mxu0 0.0
        %897 = vmatprep.subr.mxu0 0.0
        %898 = vmatpush1.msra.mxu0 0.0
        %899 = vmatprep.subr.mxu0 0.0
        %900 = vmatpush1.msra.mxu0 0.0
        %901 = vmatprep.subr.mxu0 0.0
        %902 = vmatpush1.msra.mxu0 0.0
        %903 = vmatprep.subr.mxu0 0.0
        %904 = vmatpush1.msra.mxu0 0.0
        %905 = vmatprep.subr.mxu0 0.0
        %906 = vmatpush1.msra.mxu0 0.0
        %907 = vmatprep.subr.mxu0 0.0
        %908 = vmatpush1.msra.mxu0 0.0
        %909 = vmatprep.subr.mxu0 0.0
        %910 = vmatpush1.msra.mxu0 0.0
        %911 = vmatprep.subr.mxu0 0.0
        %912 = vmatpush1.msra.mxu0 0.0
        %913 = vmatprep.subr.mxu0 0.0
        %914 = vmatpush1.msra.mxu0 0.0
        %915 = vmatprep.subr.mxu0 0.0
        %916 = vmatpush1.msra.mxu0 0.0
        %917 = vmatprep.subr.mxu0 0.0
        %918 = vmatpush1.msra.mxu0 0.0
        %919 = vmatprep.subr.mxu0 0.0
        %920 = vmatpush1.msra.mxu0 0.0
        %921 = vmatprep.subr.mxu0 0.0
        %922 = vmatpush1.msra.mxu0 0.0
        %923 = vmatprep.subr.mxu0 0.0
        %924 = vmatpush1.msra.mxu0 0.0
        %925 = vmatprep.subr.mxu0 0.0
        %926 = vmatpush1.msra.mxu0 0.0
        %927 = vmatprep.subr.mxu0 0.0
        %928 = vmatpush1.msra.mxu0 0.0
        %929 = vmatprep.subr.mxu0 0.0
        %930 = vmatpush1.msra.mxu0 0.0
        %931 = vmatprep.mubr.f32.mxu0 0.0
        %932 = vmatmul.mubr.f32.gmra.mrb[0].mxu0 %v865
        %v933 = vpop.f32.mrb[0].mxu0
        %v934 = vadd.f32 0.0, %v933
        %v935 = vpop.f32.mrb[0].mxu0
        %936 = vdwg.mxu0
        %v937 = vrcp.pop %v860
        %v938 = vmul.f32 1.0, %v937
        %v939 = vmul.f32 %v934, %v938
        %941 = vrot.lane.b32.xlu0 %v198, 32
        %v942 = vpop.permute.xlu0 %941
        %v945 = vsel %vm289, %v939, 0
        %947 = vmatprep.subr.mxu0 0.0
        %948 = vmatpush1.msra.mxu0 %v942
        %949 = vmatprep.subr.mxu0 0.0
        %950 = vmatpush1.msra.mxu0 0.0
        %951 = vmatprep.subr.mxu0 0.0
        %952 = vmatpush1.msra.mxu0 0.0
        %953 = vmatprep.subr.mxu0 0.0
        %954 = vmatpush1.msra.mxu0 0.0
        %955 = vmatprep.subr.mxu0 0.0
        %956 = vmatpush1.msra.mxu0 0.0
        %957 = vmatprep.subr.mxu0 0.0
        %958 = vmatpush1.msra.mxu0 0.0
        %959 = vmatprep.subr.mxu0 0.0
        %960 = vmatpush1.msra.mxu0 0.0
        %961 = vmatprep.subr.mxu0 0.0
        %962 = vmatpush1.msra.mxu0 0.0
        %963 = vmatprep.subr.mxu0 0.0
        %964 = vmatpush1.msra.mxu0 0.0
        %965 = vmatprep.subr.mxu0 0.0
        %966 = vmatpush1.msra.mxu0 0.0
        %967 = vmatprep.subr.mxu0 0.0
        %968 = vmatpush1.msra.mxu0 0.0
        %969 = vmatprep.subr.mxu0 0.0
        %970 = vmatpush1.msra.mxu0 0.0
        %971 = vmatprep.subr.mxu0 0.0
        %972 = vmatpush1.msra.mxu0 0.0
        %973 = vmatprep.subr.mxu0 0.0
        %974 = vmatpush1.msra.mxu0 0.0
        %975 = vmatprep.subr.mxu0 0.0
        %976 = vmatpush1.msra.mxu0 0.0
        %977 = vmatprep.subr.mxu0 0.0
        %978 = vmatpush1.msra.mxu0 0.0
        %979 = vmatprep.subr.mxu0 0.0
        %980 = vmatpush1.msra.mxu0 0.0
        %981 = vmatprep.subr.mxu0 0.0
        %982 = vmatpush1.msra.mxu0 0.0
        %983 = vmatprep.subr.mxu0 0.0
        %984 = vmatpush1.msra.mxu0 0.0
        %985 = vmatprep.subr.mxu0 0.0
        %986 = vmatpush1.msra.mxu0 0.0
        %987 = vmatprep.subr.mxu0 0.0
        %988 = vmatpush1.msra.mxu0 0.0
        %989 = vmatprep.subr.mxu0 0.0
        %990 = vmatpush1.msra.mxu0 0.0
        %991 = vmatprep.subr.mxu0 0.0
        %992 = vmatpush1.msra.mxu0 0.0
        %993 = vmatprep.subr.mxu0 0.0
        %994 = vmatpush1.msra.mxu0 0.0
        %995 = vmatprep.subr.mxu0 0.0
        %996 = vmatpush1.msra.mxu0 0.0
        %997 = vmatprep.subr.mxu0 0.0
        %998 = vmatpush1.msra.mxu0 0.0
        %999 = vmatprep.subr.mxu0 0.0
        %1000 = vmatpush1.msra.mxu0 0.0
        %1001 = vmatprep.subr.mxu0 0.0
        %1002 = vmatpush1.msra.mxu0 0.0
        %1003 = vmatprep.subr.mxu0 0.0
        %1004 = vmatpush1.msra.mxu0 0.0
        %1005 = vmatprep.subr.mxu0 0.0
        %1006 = vmatpush1.msra.mxu0 0.0
        %1007 = vmatprep.subr.mxu0 0.0
        %1008 = vmatpush1.msra.mxu0 0.0
        %1009 = vmatprep.subr.mxu0 0.0
        %1010 = vmatpush1.msra.mxu0 0.0
        %1011 = vmatprep.mubr.f32.mxu0 0.0
        %1012 = vmatmul.mubr.f32.gmra.mrb[0].mxu0 %v945
        %v1013 = vpop.f32.mrb[0].mxu0
        %v1014 = vadd.f32 0.0, %v1013
        %v1015 = vpop.f32.mrb[0].mxu0
        %1016 = vdwg.mxu0
        %v1017 = vadd.f32 %v773, %v1014
        %1018 = vrot.lane.b32.xlu0 %v278, 104
        %v1019 = vpop.permute.xlu0 %1018
        %1020 = vrot.lane.b32.xlu0 %v278, 72
        %v1021 = vpop.permute.xlu0 %1020
        %v1022 = vsel %vm289, %v1019, 0
        %v1024 = vsel %vm289, %v1021, 0
        %1026 = vmatprep.subr.mxu0 0.0
        %1027 = vmatpush1.xpose.msra.mxu0 %v1024
        %1028 = vmatprep.subr.mxu0 0.0
        %1029 = vmatpush1.xpose.msra.mxu0 0.0
        %1030 = vmatprep.subr.mxu0 0.0
        %1031 = vmatpush1.xpose.msra.mxu0 0.0
        %1032 = vmatprep.subr.mxu0 0.0
        %1033 = vmatpush1.xpose.msra.mxu0 0.0
        %1034 = vmatprep.subr.mxu0 0.0
        %1035 = vmatpush1.xpose.msra.mxu0 0.0
        %1036 = vmatprep.subr.mxu0 0.0
        %1037 = vmatpush1.xpose.msra.mxu0 0.0
        %1038 = vmatprep.subr.mxu0 0.0
        %1039 = vmatpush1.xpose.msra.mxu0 0.0
        %1040 = vmatprep.subr.mxu0 0.0
        %1041 = vmatpush1.xpose.msra.mxu0 0.0
        %1042 = vmatprep.subr.mxu0 0.0
        %1043 = vmatpush1.xpose.msra.mxu0 0.0
        %1044 = vmatprep.subr.mxu0 0.0
        %1045 = vmatpush1.xpose.msra.mxu0 0.0
        %1046 = vmatprep.subr.mxu0 0.0
        %1047 = vmatpush1.xpose.msra.mxu0 0.0
        %1048 = vmatprep.subr.mxu0 0.0
        %1049 = vmatpush1.xpose.msra.mxu0 0.0
        %1050 = vmatprep.subr.mxu0 0.0
        %1051 = vmatpush1.xpose.msra.mxu0 0.0
        %1052 = vmatprep.subr.mxu0 0.0
        %1053 = vmatpush1.xpose.msra.mxu0 0.0
        %1054 = vmatprep.subr.mxu0 0.0
        %1055 = vmatpush1.xpose.msra.mxu0 0.0
        %1056 = vmatprep.subr.mxu0 0.0
        %1057 = vmatpush1.xpose.msra.mxu0 0.0
        %1058 = vmatprep.subr.mxu0 0.0
        %1059 = vmatpush1.xpose.msra.mxu0 0.0
        %1060 = vmatprep.subr.mxu0 0.0
        %1061 = vmatpush1.xpose.msra.mxu0 0.0
        %1062 = vmatprep.subr.mxu0 0.0
        %1063 = vmatpush1.xpose.msra.mxu0 0.0
        %1064 = vmatprep.subr.mxu0 0.0
        %1065 = vmatpush1.xpose.msra.mxu0 0.0
        %1066 = vmatprep.subr.mxu0 0.0
        %1067 = vmatpush1.xpose.msra.mxu0 0.0
        %1068 = vmatprep.subr.mxu0 0.0
        %1069 = vmatpush1.xpose.msra.mxu0 0.0
        %1070 = vmatprep.subr.mxu0 0.0
        %1071 = vmatpush1.xpose.msra.mxu0 0.0
        %1072 = vmatprep.subr.mxu0 0.0
        %1073 = vmatpush1.xpose.msra.mxu0 0.0
        %1074 = vmatprep.subr.mxu0 0.0
        %1075 = vmatpush1.xpose.msra.mxu0 0.0
        %1076 = vmatprep.subr.mxu0 0.0
        %1077 = vmatpush1.xpose.msra.mxu0 0.0
        %1078 = vmatprep.subr.mxu0 0.0
        %1079 = vmatpush1.xpose.msra.mxu0 0.0
        %1080 = vmatprep.subr.mxu0 0.0
        %1081 = vmatpush1.xpose.msra.mxu0 0.0
        %1082 = vmatprep.subr.mxu0 0.0
        %1083 = vmatpush1.xpose.msra.mxu0 0.0
        %1084 = vmatprep.subr.mxu0 0.0
        %1085 = vmatpush1.xpose.msra.mxu0 0.0
        %1086 = vmatprep.subr.mxu0 0.0
        %1087 = vmatpush1.xpose.msra.mxu0 0.0
        %1088 = vmatprep.subr.mxu0 0.0
        %1089 = vmatpush1.xpose.msra.mxu0 0.0
        %1090 = vmatprep.mubr.f32.mxu0 0.0
        %1091 = vmatmul.mubr.f32.gmra.mrb[0].mxu0 %v1022
        %v1092 = vpop.f32.mrb[0].mxu0
        %v1093 = vadd.f32 0.0, %v1092
        %v1094 = vpop.f32.mrb[0].mxu0
        %1095 = vdwg.mxu0
        %v1096 = vsel %vm289, %v1093, -inf
        %1097 = vmax.xlane.f32.xlu0 %v1096
        %v1098 = vpop.xlane.xlu0 %1097
        %v1099 = vsub.f32 %v1093, %v1098
        %v1100 = vmul.f32 %v1099, 1.442695
        %v1101 = vpow.pop %v1100
        %v1102 = vsel %vm289, %v1101, 0.0
        %1103 = vadd.xlane.f32.xlu0 %v1102
        %v1104 = vpop.xlane.xlu0 %1103
        %1105 = vrot.lane.b32.xlu0 %v278, 40
        %v1106 = vpop.permute.xlu0 %1105
        %v1109 = vsel %vm289, %v1101, 0
        %1111 = vmatprep.subr.mxu0 0.0
        %1112 = vmatpush1.msra.mxu0 %v1106
        %1113 = vmatprep.subr.mxu0 0.0
        %1114 = vmatpush1.msra.mxu0 0.0
        %1115 = vmatprep.subr.mxu0 0.0
        %1116 = vmatpush1.msra.mxu0 0.0
        %1117 = vmatprep.subr.mxu0 0.0
        %1118 = vmatpush1.msra.mxu0 0.0
        %1119 = vmatprep.subr.mxu0 0.0
        %1120 = vmatpush1.msra.mxu0 0.0
        %1121 = vmatprep.subr.mxu0 0.0
        %1122 = vmatpush1.msra.mxu0 0.0
        %1123 = vmatprep.subr.mxu0 0.0
        %1124 = vmatpush1.msra.mxu0 0.0
        %1125 = vmatprep.subr.mxu0 0.0
        %1126 = vmatpush1.msra.mxu0 0.0
        %1127 = vmatprep.subr.mxu0 0.0
        %1128 = vmatpush1.msra.mxu0 0.0
        %1129 = vmatprep.subr.mxu0 0.0
        %1130 = vmatpush1.msra.mxu0 0.0
        %1131 = vmatprep.subr.mxu0 0.0
        %1132 = vmatpush1.msra.mxu0 0.0
        %1133 = vmatprep.subr.mxu0 0.0
        %1134 = vmatpush1.msra.mxu0 0.0
        %1135 = vmatprep.subr.mxu0 0.0
        %1136 = vmatpush1.msra.mxu0 0.0
        %1137 = vmatprep.subr.mxu0 0.0
        %1138 = vmatpush1.msra.mxu0 0.0
        %1139 = vmatprep.subr.mxu0 0.0
        %1140 = vmatpush1.msra.mxu0 0.0
        %1141 = vmatprep.subr.mxu0 0.0
        %1142 = vmatpush1.msra.mxu0 0.0
        %1143 = vmatprep.subr.mxu0 0.0
        %1144 = vmatpush1.msra.mxu0 0.0
        %1145 = vmatprep.subr.mxu0 0.0
        %1146 = vmatpush1.msra.mxu0 0.0
        %1147 = vmatprep.subr.mxu0 0.0
        %1148 = vmatpush1.msra.mxu0 0.0
        %1149 = vmatprep.subr.mxu0 0.0
        %1150 = vmatpush1.msra.mxu0 0.0
        %1151 = vmatprep.subr.mxu0 0.0
        %1152 = vmatpush1.msra.mxu0 0.0
        %1153 = vmatprep.subr.mxu0 0.0
        %1154 = vmatpush1.msra.mxu0 0.0
        %1155 = vmatprep.subr.mxu0 0.0
        %1156 = vmatpush1.msra.mxu0 0.0
        %1157 = vmatprep.subr.mxu0 0.0
        %1158 = vmatpush1.msra.mxu0 0.0
        %1159 = vmatprep.subr.mxu0 0.0
        %1160 = vmatpush1.msra.mxu0 0.0
        %1161 = vmatprep.subr.mxu0 0.0
        %1162 = vmatpush1.msra.mxu0 0.0
        %1163 = vmatprep.subr.mxu0 0.0
        %1164 = vmatpush1.msra.mxu0 0.0
        %1165 = vmatprep.subr.mxu0 0.0
        %1166 = vmatpush1.msra.mxu0 0.0
        %1167 = vmatprep.subr.mxu0 0.0
        %1168 = vmatpush1.msra.mxu0 0.0
        %1169 = vmatprep.subr.mxu0 0.0
        %1170 = vmatpush1.msra.mxu0 0.0
        %1171 = vmatprep.subr.mxu0 0.0
        %1172 = vmatpush1.msra.mxu0 0.0
        %1173 = vmatprep.subr.mxu0 0.0
        %1174 = vmatpush1.msra.mxu0 0.0
        %1175 = vmatprep.mubr.f32.mxu0 0.0
        %1176 = vmatmul.mubr.f32.gmra.mrb[0].mxu0 %v1109
        %v1177 = vpop.f32.mrb[0].mxu0
        %v1178 = vadd.f32 0.0, %v1177
        %v1179 = vpop.f32.mrb[0].mxu0
        %1180 = vdwg.mxu0
        %v1181 = vrcp.pop %v1104
        %v1182 = vmul.f32 1.0, %v1181
        %v1183 = vmul.f32 %v1178, %v1182
        %1185 = vrot.lane.b32.xlu0 %v200, 32
        %v1186 = vpop.permute.xlu0 %1185
        %v1189 = vsel %vm289, %v1183, 0
        %1191 = vmatprep.subr.mxu0 0.0
        %1192 = vmatpush1.msra.mxu0 %v1186
        %1193 = vmatprep.subr.mxu0 0.0
        %1194 = vmatpush1.msra.mxu0 0.0
        %1195 = vmatprep.subr.mxu0 0.0
        %1196 = vmatpush1.msra.mxu0 0.0
        %1197 = vmatprep.subr.mxu0 0.0
        %1198 = vmatpush1.msra.mxu0 0.0
        %1199 = vmatprep.subr.mxu0 0.0
        %1200 = vmatpush1.msra.mxu0 0.0
        %1201 = vmatprep.subr.mxu0 0.0
        %1202 = vmatpush1.msra.mxu0 0.0
        %1203 = vmatprep.subr.mxu0 0.0
        %1204 = vmatpush1.msra.mxu0 0.0
        %1205 = vmatprep.subr.mxu0 0.0
        %1206 = vmatpush1.msra.mxu0 0.0
        %1207 = vmatprep.subr.mxu0 0.0
        %1208 = vmatpush1.msra.mxu0 0.0
        %1209 = vmatprep.subr.mxu0 0.0
        %1210 = vmatpush1.msra.mxu0 0.0
        %1211 = vmatprep.subr.mxu0 0.0
        %1212 = vmatpush1.msra.mxu0 0.0
        %1213 = vmatprep.subr.mxu0 0.0
        %1214 = vmatpush1.msra.mxu0 0.0
        %1215 = vmatprep.subr.mxu0 0.0
        %1216 = vmatpush1.msra.mxu0 0.0
        %1217 = vmatprep.subr.mxu0 0.0
        %1218 = vmatpush1.msra.mxu0 0.0
        %1219 = vmatprep.subr.mxu0 0.0
        %1220 = vmatpush1.msra.mxu0 0.0
        %1221 = vmatprep.subr.mxu0 0.0
        %1222 = vmatpush1.msra.mxu0 0.0
        %1223 = vmatprep.subr.mxu0 0.0
        %1224 = vmatpush1.msra.mxu0 0.0
        %1225 = vmatprep.subr.mxu0 0.0
        %1226 = vmatpush1.msra.mxu0 0.0
        %1227 = vmatprep.subr.mxu0 0.0
        %1228 = vmatpush1.msra.mxu0 0.0
        %1229 = vmatprep.subr.mxu0 0.0
        %1230 = vmatpush1.msra.mxu0 0.0
        %1231 = vmatprep.subr.mxu0 0.0
        %1232 = vmatpush1.msra.mxu0 0.0
        %1233 = vmatprep.subr.mxu0 0.0
        %1234 = vmatpush1.msra.mxu0 0.0
        %1235 = vmatprep.subr.mxu0 0.0
        %1236 = vmatpush1.msra.mxu0 0.0
        %1237 = vmatprep.subr.mxu0 0.0
        %1238 = vmatpush1.msra.mxu0 0.0
        %1239 = vmatprep.subr.mxu0 0.0
        %1240 = vmatpush1.msra.mxu0 0.0
        %1241 = vmatprep.subr.mxu0 0.0
        %1242 = vmatpush1.msra.mxu0 0.0
        %1243 = vmatprep.subr.mxu0 0.0
        %1244 = vmatpush1.msra.mxu0 0.0
        %1245 = vmatprep.subr.mxu0 0.0
        %1246 = vmatpush1.msra.mxu0 0.0
        %1247 = vmatprep.subr.mxu0 0.0
        %1248 = vmatpush1.msra.mxu0 0.0
        %1249 = vmatprep.subr.mxu0 0.0
        %1250 = vmatpush1.msra.mxu0 0.0
        %1251 = vmatprep.subr.mxu0 0.0
        %1252 = vmatpush1.msra.mxu0 0.0
        %1253 = vmatprep.subr.mxu0 0.0
        %1254 = vmatpush1.msra.mxu0 0.0
        %1255 = vmatprep.mubr.f32.mxu0 0.0
        %1256 = vmatmul.mubr.f32.gmra.mrb[0].mxu0 %v1189
        %v1257 = vpop.f32.mrb[0].mxu0
        %v1258 = vadd.f32 0.0, %v1257
        %v1259 = vpop.f32.mrb[0].mxu0
        %1260 = vdwg.mxu0
        %v1261 = vadd.f32 %v1017, %v1258
        %v1262 = vsel %vm207, %v1261, 0.0
        %1263 = vadd.xlane.f32.xlu0 %v1262
        %v1264 = vpop.xlane.xlu0 %1263
        %v1265 = vrcp.pop 32.0
        %v1266 = vmul.f32 %v1264, %v1265
        %v1267 = vsub.f32 %v1261, %v1266
        %v1268 = vmul.f32 %v1267, %v1267
        %v1269 = vsel %vm207, %v1268, 0.0
        %1270 = vadd.xlane.f32.xlu0 %v1269
        %v1271 = vpop.xlane.xlu0 %1270
        %v1272 = vmul.f32 %v1271, %v1265
        %v1273 = vadd.f32 %v1272, 1e-05
        %v1274 = vrsqrt.pop %v1273
        %v1275 = vmul.f32 %v1267, %v1274
        %v1276 = vlaneseq
        %v1277 = vshrl.u32 %v1276, 7
        %v1278 = vsub.s32 3, %v1277
        %v1279 = vrot.slane %v202, %v1278
        %v1280 = vmul.f32 %v1275, %v1279
        %v1281 = vlaneseq
        %v1282 = vshrl.u32 %v1281, 7
        %v1283 = vsub.s32 4, %v1282
        %v1284 = vrot.slane %v202, %v1283
        %v1285 = vadd.f32 %v1280, %v1284
        %v1286 = vlaneseq
        %v1287 = vshrl.u32 %v1286, 7
        %v1288 = vsub.s32 1, %v1287
        %v1289 = vrot.slane %v202, %v1288
        %v1291 = vsel %vm207, %v1285, 0
        %1293 = vmatprep.subr.mxu0 0.0
        %1294 = vmatpush1.msra.mxu0 %v195
        %1295 = vmatprep.subr.mxu0 0.0
        %1296 = vmatpush1.msra.mxu0 %v197
        %1297 = vmatprep.subr.mxu0 0.0
        %1298 = vmatpush1.msra.mxu0 %v199
        %1299 = vmatprep.subr.mxu0 0.0
        %1300 = vmatpush1.msra.mxu0 %v201
        %1301 = vmatprep.subr.mxu0 0.0
        %1302 = vmatpush1.msra.mxu0 0.0
        %1303 = vmatprep.subr.mxu0 0.0
        %1304 = vmatpush1.msra.mxu0 0.0
        %1305 = vmatprep.subr.mxu0 0.0
        %1306 = vmatpush1.msra.mxu0 0.0
        %1307 = vmatprep.subr.mxu0 0.0
        %1308 = vmatpush1.msra.mxu0 0.0
        %1309 = vmatprep.subr.mxu0 0.0
        %1310 = vmatpush1.msra.mxu0 0.0
        %1311 = vmatprep.subr.mxu0 0.0
        %1312 = vmatpush1.msra.mxu0 0.0
        %1313 = vmatprep.subr.mxu0 0.0
        %1314 = vmatpush1.msra.mxu0 0.0
        %1315 = vmatprep.subr.mxu0 0.0
        %1316 = vmatpush1.msra.mxu0 0.0
        %1317 = vmatprep.subr.mxu0 0.0
        %1318 = vmatpush1.msra.mxu0 0.0
        %1319 = vmatprep.subr.mxu0 0.0
        %1320 = vmatpush1.msra.mxu0 0.0
        %1321 = vmatprep.subr.mxu0 0.0
        %1322 = vmatpush1.msra.mxu0 0.0
        %1323 = vmatprep.subr.mxu0 0.0
        %1324 = vmatpush1.msra.mxu0 0.0
        %1325 = vmatprep.subr.mxu0 0.0
        %1326 = vmatpush1.msra.mxu0 0.0
        %1327 = vmatprep.subr.mxu0 0.0
        %1328 = vmatpush1.msra.mxu0 0.0
        %1329 = vmatprep.subr.mxu0 0.0
        %1330 = vmatpush1.msra.mxu0 0.0
        %1331 = vmatprep.subr.mxu0 0.0
        %1332 = vmatpush1.msra.mxu0 0.0
        %1333 = vmatprep.subr.mxu0 0.0
        %1334 = vmatpush1.msra.mxu0 0.0
        %1335 = vmatprep.subr.mxu0 0.0
        %1336 = vmatpush1.msra.mxu0 0.0
        %1337 = vmatprep.subr.mxu0 0.0
        %1338 = vmatpush1.msra.mxu0 0.0
        %1339 = vmatprep.subr.mxu0 0.0
        %1340 = vmatpush1.msra.mxu0 0.0
        %1341 = vmatprep.subr.mxu0 0.0
        %1342 = vmatpush1.msra.mxu0 0.0
        %1343 = vmatprep.subr.mxu0 0.0
        %1344 = vmatpush1.msra.mxu0 0.0
        %1345 = vmatprep.subr.mxu0 0.0
        %1346 = vmatpush1.msra.mxu0 0.0
        %1347 = vmatprep.subr.mxu0 0.0
        %1348 = vmatpush1.msra.mxu0 0.0
        %1349 = vmatprep.subr.mxu0 0.0
        %1350 = vmatpush1.msra.mxu0 0.0
        %1351 = vmatprep.subr.mxu0 0.0
        %1352 = vmatpush1.msra.mxu0 0.0
        %1353 = vmatprep.subr.mxu0 0.0
        %1354 = vmatpush1.msra.mxu0 0.0
        %1355 = vmatprep.subr.mxu0 0.0
        %1356 = vmatpush1.msra.mxu0 0.0
        %1357 = vmatprep.mubr.f32.mxu0 0.0
        %1358 = vmatmul.mubr.f32.gmra.mrb[0].mxu0 %v1291
        %v1359 = vpop.f32.mrb[0].mxu0
        %v1360 = vadd.f32 %v1289, %v1359
        %v1361 = vpop.f32.mrb[0].mxu0
        %1362 = vdwg.mxu0
        %v1363 = vmax.f32 %v1360, 0.0
        %v1364 = vld [vmem:[%s2] sm:$0xff]
        %v1365 = vld [vmem:[%s2 + $0x8] sm:$0xff]
        %v1366 = vld [vmem:[%s2 + $0x10] sm:$0xff]
        %v1367 = vld [vmem:[%s2 + $0x18] sm:$0xff]
        %v1368 = vld [vmem:[%s2 + $0x20] sm:$0xff]
        %v1369 = vld [vmem:[%s2 + $0x28] sm:$0xff]
        %v1370 = vld [vmem:[%s2 + $0x30] sm:$0xff]
        %v1371 = vld [vmem:[%s2 + $0x38] sm:$0xff]
        %v1372 = vlaneseq
        %v1373 = vshrl.u32 %v1372, 7
        %v1374 = vsub.s32 5, %v1373
        %v1375 = vrot.slane %v202, %v1374
        %vm1376 = vcmask 523264
        %v1378 = vsel %vm1376, %v1363, 0
        %1380 = vmatprep.subr.mxu0 0.0
        %1381 = vmatpush1.msra.mxu0 %v1364
        %1382 = vmatprep.subr.mxu0 0.0
        %1383 = vmatpush1.msra.mxu0 %v1365
        %1384 = vmatprep.subr.mxu0 0.0
        %1385 = vmatpush1.msra.mxu0 %v1366
        %1386 = vmatprep.subr.mxu0 0.0
        %1387 = vmatpush1.msra.mxu0 %v1367
        %1388 = vmatprep.subr.mxu0 0.0
        %1389 = vmatpush1.msra.mxu0 %v1368
        %1390 = vmatprep.subr.mxu0 0.0
        %1391 = vmatpush1.msra.mxu0 %v1369
        %1392 = vmatprep.subr.mxu0 0.0
        %1393 = vmatpush1.msra.mxu0 %v1370
        %1394 = vmatprep.subr.mxu0 0.0
        %1395 = vmatpush1.msra.mxu0 %v1371
        %1396 = vmatprep.subr.mxu0 0.0
        %1397 = vmatpush1.msra.mxu0 0.0
        %1398 = vmatprep.subr.mxu0 0.0
        %1399 = vmatpush1.msra.mxu0 0.0
        %1400 = vmatprep.subr.mxu0 0.0
        %1401 = vmatpush1.msra.mxu0 0.0
        %1402 = vmatprep.subr.mxu0 0.0
        %1403 = vmatpush1.msra.mxu0 0.0
        %1404 = vmatprep.subr.mxu0 0.0
        %1405 = vmatpush1.msra.mxu0 0.0
        %1406 = vmatprep.subr.mxu0 0.0
        %1407 = vmatpush1.msra.mxu0 0.0
        %1408 = vmatprep.subr.mxu0 0.0
        %1409 = vmatpush1.msra.mxu0 0.0
        %1410 = vmatprep.subr.mxu0 0.0
        %1411 = vmatpush1.msra.mxu0 0.0
        %1412 = vmatprep.subr.mxu0 0.0
        %1413 = vmatpush1.msra.mxu0 0.0
        %1414 = vmatprep.subr.mxu0 0.0
        %1415 = vmatpush1.msra.mxu0 0.0
        %1416 = vmatprep.subr.mxu0 0.0
        %1417 = vmatpush1.msra.mxu0 0.0
        %1418 = vmatprep.subr.mxu0 0.0
        %1419 = vmatpush1.msra.mxu0 0.0
        %1420 = vmatprep.subr.mxu0 0.0
        %1421 = vmatpush1.msra.mxu0 0.0
        %1422 = vmatprep.subr.mxu0 0.0
        %1423 = vmatpush1.msra.mxu0 0.0
        %1424 = vmatprep.subr.mxu0 0.0
        %1425 = vmatpush1.msra.mxu0 0.0
        %1426 = vmatprep.subr.mxu0 0.0
        %1427 = vmatpush1.msra.mxu0 0.0
        %1428 = vmatprep.subr.mxu0 0.0
        %1429 = vmatpush1.msra.mxu0 0.0
        %1430 = vmatprep.subr.mxu0 0.0
        %1431 = vmatpush1.msra.mxu0 0.0
        %1432 = vmatprep.subr.mxu0 0.0
        %1433 = vmatpush1.msra.mxu0 0.0
        %1434 = vmatprep.subr.mxu0 0.0
        %1435 = vmatpush1.msra.mxu0 0.0
        %1436 = vmatprep.subr.mxu0 0.0
        %1437 = vmatpush1.msra.mxu0 0.0
        %1438 = vmatprep.subr.mxu0 0.0
        %1439 = vmatpush1.msra.mxu0 0.0
        %1440 = vmatprep.subr.mxu0 0.0
        %1441 = vmatpush1.msra.mxu0 0.0
        %1442 = vmatprep.subr.mxu0 0.0
        %1443 = vmatpush1.msra.mxu0 0.0
        %1444 = vmatprep.mubr.f32.mxu0 0.0
        %1445 = vmatmul.mubr.f32.gmra.mrb[0].mxu0 %v1378
        %v1446 = vpop.f32.mrb[0].mxu0
        %v1447 = vadd.f32 %v1375, %v1446
        %v1448 = vpop.f32.mrb[0].mxu0
        %1449 = vdwg.mxu0
        %v1450 = vadd.f32 %v1447, %v1285
        %v1451 = vsel %vm207, %v1450, 0.0
        %1452 = vadd.xlane.f32.xlu0 %v1451
        %v1453 = vpop.xlane.xlu0 %1452
        %v1454 = vmul.f32 %v1453, %v1265
        %v1455 = vsub.f32 %v1450, %v1454
        %v1456 = vmul.f32 %v1455, %v1455
        %v1457 = vsel %vm207, %v1456, 0.0
        %1458 = vadd.xlane.f32.xlu0 %v1457
        %v1459 = vpop.xlane.xlu0 %1458
        %v1460 = vmul.f32 %v1459, %v1265
        %v1461 = vadd.f32 %v1460, 1e-05
        %v1462 = vrsqrt.pop %v1461
        %v1463 = vmul.f32 %v1455, %v1462
        %v1464 = vlaneseq
        %v1465 = vshrl.u32 %v1464, 7
        %v1466 = vsub.s32 6, %v1465
        %v1467 = vrot.slane %v202, %v1466
        %v1468 = vmul.f32 %v1463, %v1467
        %v1469 = vlaneseq
        %v1470 = vshrl.u32 %v1469, 7
        %v1471 = vsub.s32 7, %v1470
        %v1472 = vrot.slane %v202, %v1471
        %v1473 = vadd.f32 %v1468, %v1472
        %1474 = vst.msk [vmem:[%s188] sm:$0xff] %vm207, %v1473
        %s1475 = sand.u32 %s115, 1
        %s1476 = scalar_lea.sflag [#allocation3], %s1475
        %s1477 = sand.u32 %s115, 1
        %s1478 = smul.addr %s1477, 8
        %s1479 = scalar_lea.vmem [#allocation2], %s1478
        // Predicated region
        $region37: #{tpu_custom_call.1} parent=35 // pred_check
          %p1480 = pneg %p125
        $region38: #{tpu_custom_call.1} parent=35 // pred_check_branch
          %1482 = sbr.rel (%p1480) target = $region40
        $region39: #{tpu_custom_call.1} parent=35 // pred_region
          %s1484 = ssub.s32 128, 128
          %1485 = vsyncadd %s1476, %s1484
          %s1486 = smul.addr %s18, 128
          %s1487 = scalar_lea.hbm %s4, %s1486
          %s1489 = sshll.u32 %s1479, 4
          %s1490 = int_to_ptr.vmem [resolvable:$true] %s1489
          %1492 = dma.vmem_to_hbm [thread:$0]  %s1490, 128, %s1487, %s1476
        $region40: #{tpu_custom_call.1} parent=35 // pred_fallthru
          _
      $region36: #{tpu_custom_call.1} parent=5 // pred_fallthru
        _
      %p1493 = scmp.le.s32.totalorder 2, %s13
      // Predicated region
      $region41: #{tpu_custom_call.1} parent=5 // pred_check
        %p1494 = pneg %p1493
      $region42: #{tpu_custom_call.1} parent=5 // pred_check_branch
        %1496 = sbr.rel (%p1494) target = $region44
      $region43: #{tpu_custom_call.1} parent=5 // pred_region
        %s1497 = ssub.s32 %s13, 2
        // Predicated region
        $region45: #{tpu_custom_call.1} parent=43 // pred_check
          %p1498 = pneg %p131
        $region46: #{tpu_custom_call.1} parent=43 // pred_check_branch
          %1500 = sbr.rel (%p1498) target = $region48
        $region47: #{tpu_custom_call.1} parent=43 // pred_region
          %s1501 = sand.u32 %s116, 1
          %s1502 = scalar_lea.sflag [#allocation3], %s1501
          %s1503 = sand.u32 %s116, 1
          %s1504 = smul.addr %s1503, 8
          %s1505 = scalar_lea.vmem [#allocation2], %s1504
          %1506 = dma.done %s1502, 128
        $region48: #{tpu_custom_call.1} parent=43 // pred_fallthru
          _
      $region44: #{tpu_custom_call.1} parent=5 // pred_fallthru
        _
    $region6: #{tpu_custom_call.1} parent=1 // loop_footer
      %s17 = sadd.s32 1, %s13
    $region7: #{tpu_custom_call.1} parent=1 // loop_footer_branch
      %12 = sbr.rel target = $region3
    $region8: #{tpu_custom_call.1} parent=1 // loop_exit
      _
    %1507 = vsyncpa [#allocation3], 1
    %s1508 = scalar_lea.sflag [#allocation3], 1
    %1509 = vsyncpa %s1508, 1

</llo_original>
